<compile_context>
chip_gen: v7x
topology: tpu7x:2x2x1
jax: 0.10.0
libtpu: 0.0.40
codegen_flags: <defaults>
</compile_context>

<pallas_src>
import numpy as np
import jax
import jax.numpy as jnp
from jax.experimental import pallas as pl
from jax.experimental.pallas import tpu as pltpu


def _round_up(x, m):
    return ((x + m - 1) // m) * m


def _make_posenc_kernel(d_in, num_freqs, freq_factor, include_input, out_dtype):
    # Compile-time constants baked into the kernel (36 floats max) — no DMA.
    half_pi = float(np.float32(np.pi * 0.5))
    groups = []  # (freq, phase), frequency-major, matching torch ordering.
    for k in range(num_freqs):
        f = float(freq_factor) * float(2.0 ** k)
        groups.append((f, 0.0))        # sin(f * x)
        groups.append((f, half_pi))    # sin(f * x + pi/2) == cos(f * x)

    base = d_in if include_input else 0

    def kernel(x_ref, out_ref):
        x = x_ref[...].astype(jnp.float32)                     # (tb, d_in)
        if include_input:
            out_ref[:, :d_in] = x.astype(out_dtype)
        # Unrolled static loop: per group one scalar*vreg FMA + one EUP sin,
        # stored to a contiguous (static) lane slice of the output tile.
        for g, (f, ph) in enumerate(groups):
            start = base + g * d_in
            out_ref[:, start:start + d_in] = jnp.sin(ph + x * f).astype(out_dtype)

    return kernel


def positional_encoding(x, num_freqs=6, freq_factor=np.pi, include_input=True,
                        block_batch=512, out_dtype=jnp.float32):
    """Apply NeRF positional encoding to x of shape (batch, d_in)."""
    B, d_in = x.shape
    d_embed = 2 * num_freqs * d_in
    d_out = d_embed + (d_in if include_input else 0)

    # Large batch tiles (bounded by the padded batch itself); multiple of 8 so
    # the (sublane) block dim satisfies the (8, 128) tiling constraint.
    tb = max(8, min(int(block_batch), _round_up(B, 8)))
    tb = _round_up(tb, 8)
    B_pad = _round_up(B, tb)
    x = x.astype(jnp.float32)
    if B_pad != B:
        x = jnp.pad(x, ((0, B_pad - B), (0, 0)))

    kernel = _make_posenc_kernel(d_in, num_freqs, freq_factor,
                                 include_input, out_dtype)

    out = pl.pallas_call(
        kernel,
        out_shape=jax.ShapeDtypeStruct((B_pad, d_out), out_dtype),
        grid=(B_pad // tb,),
        in_specs=[pl.BlockSpec((tb, d_in), lambda i: (i, 0))],
        out_specs=pl.BlockSpec((tb, d_out), lambda i: (i, 0)),
        compiler_params=pltpu.CompilerParams(
            dimension_semantics=("parallel",)),
    )(x)

    if B_pad != B:
        out = out[:B]
    return out


def _reference(x, num_freqs=6, freq_factor=np.pi, include_input=True):
    """Numpy port of the torch forward (float32)."""
    x = np.asarray(x, dtype=np.float32)
    B, d_in = x.shape
    freqs = (freq_factor * (2.0 ** np.arange(num_freqs))).astype(np.float32)
    freqs_rep = np.repeat(freqs, 2).reshape(1, -1, 1)
    phases = np.zeros(2 * num_freqs, dtype=np.float32)
    phases[1::2] = np.float32(np.pi * 0.5)
    phases = phases.reshape(1, -1, 1)
    embed = np.repeat(x[:, None, :], 2 * num_freqs, axis=1)
    embed = np.sin(phases + embed * freqs_rep)
    embed = embed.reshape(B, -1)
    if include_input:
        embed = np.concatenate([x, embed], axis=-1)
    return embed


if __name__ == "__main__":
    key = jax.random.PRNGKey(0)
    B, d_in, num_freqs = 16, 3, 6
    x = jax.random.normal(key, (B, d_in), dtype=jnp.float32)

    out = positional_encoding(x, num_freqs=num_freqs, freq_factor=np.pi,
                              include_input=True)
    out = jax.block_until_ready(out)
    ref = _reference(np.asarray(x), num_freqs=num_freqs,
                     freq_factor=np.pi, include_input=True)
    # TPU EUP sin vs libm differs by O(1e-5) at large arguments (f*x ~ 250);
    # 1e-4 is above that but still catches any real ordering/formula bug.
    np.testing.assert_allclose(np.asarray(out), ref, rtol=1e-4, atol=1e-4)

    # Ragged batch (not a multiple of the block) + include_input=False path.
    x2 = jax.random.normal(jax.random.PRNGKey(1), (13, 3), dtype=jnp.float32)
    out2 = jax.block_until_ready(
        positional_encoding(x2, num_freqs=4, freq_factor=np.pi,
                            include_input=False))
    ref2 = _reference(np.asarray(x2), num_freqs=4, freq_factor=np.pi,
                      include_input=False)
    np.testing.assert_allclose(np.asarray(out2), ref2, rtol=1e-4, atol=1e-4)

    print("KERNEL_OK")
</pallas_src>

<mosaic_0001>
module attributes {stable_mosaic.version = 11 : i64} {
  func.func @kernel(%arg0: i32, %arg1: memref<16x3xf32, #tpu.memory_space<vmem>>, %arg2: memref<16x39xf32, #tpu.memory_space<vmem>>) attributes {dimension_semantics = [#tpu.dimension_semantics<parallel>], iteration_bounds = array<i64: 1>, scalar_prefetch = 0 : i64, scratch_operands = 0 : i64, tpu.core_type = #tpu.core_type<tc>, window_params = [{transform_indices = @transform_0, window_bounds = array<i64: 16, 3>}, {transform_indices = @transform_1, window_bounds = array<i64: 16, 39>}]} {
    %c0 = arith.constant 0 : index
    %c0_0 = arith.constant 0 : index
    %0 = vector.load %arg1[%c0, %c0_0] : memref<16x3xf32, #tpu.memory_space<vmem>>, vector<16x3xf32>
    %c0_1 = arith.constant 0 : index
    %c0_2 = arith.constant 0 : index
    %1 = vector.load %arg2[%c0_1, %c0_2] : memref<16x39xf32, #tpu.memory_space<vmem>>, vector<16x3xf32>
    tpu.vector_store %arg2[%c0_1, %c0_2], %0 {strides = array<i32>} : memref<16x39xf32, #tpu.memory_space<vmem>>, vector<16x3xf32>,
    %cst = arith.constant 3.14159274 : f32
    %2 = vector.broadcast %cst : f32 to vector<16x3xf32>
    %3 = arith.mulf %0, %2 : vector<16x3xf32>
    %cst_3 = arith.constant 0.000000e+00 : f32
    %4 = vector.broadcast %cst_3 : f32 to vector<16x3xf32>
    %5 = arith.addf %4, %3 : vector<16x3xf32>
    %6 = math.sin %5 : vector<16x3xf32>
    %c0_4 = arith.constant 0 : index
    %c3 = arith.constant 3 : index
    %7 = vector.load %arg2[%c0_4, %c3] : memref<16x39xf32, #tpu.memory_space<vmem>>, vector<16x3xf32>
    tpu.vector_store %arg2[%c0_4, %c3], %6 {strides = array<i32>} : memref<16x39xf32, #tpu.memory_space<vmem>>, vector<16x3xf32>,
    %cst_5 = arith.constant 3.14159274 : f32
    %8 = vector.broadcast %cst_5 : f32 to vector<16x3xf32>
    %9 = arith.mulf %0, %8 : vector<16x3xf32>
    %cst_6 = arith.constant 1.57079637 : f32
    %10 = vector.broadcast %cst_6 : f32 to vector<16x3xf32>
    %11 = arith.addf %10, %9 : vector<16x3xf32>
    %12 = math.sin %11 : vector<16x3xf32>
    %c0_7 = arith.constant 0 : index
    %c6 = arith.constant 6 : index
    %13 = vector.load %arg2[%c0_7, %c6] : memref<16x39xf32, #tpu.memory_space<vmem>>, vector<16x3xf32>
    tpu.vector_store %arg2[%c0_7, %c6], %12 {strides = array<i32>} : memref<16x39xf32, #tpu.memory_space<vmem>>, vector<16x3xf32>,
    %cst_8 = arith.constant 6.28318548 : f32
    %14 = vector.broadcast %cst_8 : f32 to vector<16x3xf32>
    %15 = arith.mulf %0, %14 : vector<16x3xf32>
    %cst_9 = arith.constant 0.000000e+00 : f32
    %16 = vector.broadcast %cst_9 : f32 to vector<16x3xf32>
    %17 = arith.addf %16, %15 : vector<16x3xf32>
    %18 = math.sin %17 : vector<16x3xf32>
    %c0_10 = arith.constant 0 : index
    %c9 = arith.constant 9 : index
    %19 = vector.load %arg2[%c0_10, %c9] : memref<16x39xf32, #tpu.memory_space<vmem>>, vector<16x3xf32>
    tpu.vector_store %arg2[%c0_10, %c9], %18 {strides = array<i32>} : memref<16x39xf32, #tpu.memory_space<vmem>>, vector<16x3xf32>,
    %cst_11 = arith.constant 6.28318548 : f32
    %20 = vector.broadcast %cst_11 : f32 to vector<16x3xf32>
    %21 = arith.mulf %0, %20 : vector<16x3xf32>
    %cst_12 = arith.constant 1.57079637 : f32
    %22 = vector.broadcast %cst_12 : f32 to vector<16x3xf32>
    %23 = arith.addf %22, %21 : vector<16x3xf32>
    %24 = math.sin %23 : vector<16x3xf32>
    %c0_13 = arith.constant 0 : index
    %c12 = arith.constant 12 : index
    %25 = vector.load %arg2[%c0_13, %c12] : memref<16x39xf32, #tpu.memory_space<vmem>>, vector<16x3xf32>
    tpu.vector_store %arg2[%c0_13, %c12], %24 {strides = array<i32>} : memref<16x39xf32, #tpu.memory_space<vmem>>, vector<16x3xf32>,
    %cst_14 = arith.constant 12.566371 : f32
    %26 = vector.broadcast %cst_14 : f32 to vector<16x3xf32>
    %27 = arith.mulf %0, %26 : vector<16x3xf32>
    %cst_15 = arith.constant 0.000000e+00 : f32
    %28 = vector.broadcast %cst_15 : f32 to vector<16x3xf32>
    %29 = arith.addf %28, %27 : vector<16x3xf32>
    %30 = math.sin %29 : vector<16x3xf32>
    %c0_16 = arith.constant 0 : index
    %c15 = arith.constant 15 : index
    %31 = vector.load %arg2[%c0_16, %c15] : memref<16x39xf32, #tpu.memory_space<vmem>>, vector<16x3xf32>
    tpu.vector_store %arg2[%c0_16, %c15], %30 {strides = array<i32>} : memref<16x39xf32, #tpu.memory_space<vmem>>, vector<16x3xf32>,
    %cst_17 = arith.constant 12.566371 : f32
    %32 = vector.broadcast %cst_17 : f32 to vector<16x3xf32>
    %33 = arith.mulf %0, %32 : vector<16x3xf32>
    %cst_18 = arith.constant 1.57079637 : f32
    %34 = vector.broadcast %cst_18 : f32 to vector<16x3xf32>
    %35 = arith.addf %34, %33 : vector<16x3xf32>
    %36 = math.sin %35 : vector<16x3xf32>
    %c0_19 = arith.constant 0 : index
    %c18 = arith.constant 18 : index
    %37 = vector.load %arg2[%c0_19, %c18] : memref<16x39xf32, #tpu.memory_space<vmem>>, vector<16x3xf32>
    tpu.vector_store %arg2[%c0_19, %c18], %36 {strides = array<i32>} : memref<16x39xf32, #tpu.memory_space<vmem>>, vector<16x3xf32>,
    %cst_20 = arith.constant 25.1327419 : f32
    %38 = vector.broadcast %cst_20 : f32 to vector<16x3xf32>
    %39 = arith.mulf %0, %38 : vector<16x3xf32>
    %cst_21 = arith.constant 0.000000e+00 : f32
    %40 = vector.broadcast %cst_21 : f32 to vector<16x3xf32>
    %41 = arith.addf %40, %39 : vector<16x3xf32>
    %42 = math.sin %41 : vector<16x3xf32>
    %c0_22 = arith.constant 0 : index
    %c21 = arith.constant 21 : index
    %43 = vector.load %arg2[%c0_22, %c21] : memref<16x39xf32, #tpu.memory_space<vmem>>, vector<16x3xf32>
    tpu.vector_store %arg2[%c0_22, %c21], %42 {strides = array<i32>} : memref<16x39xf32, #tpu.memory_space<vmem>>, vector<16x3xf32>,
    %cst_23 = arith.constant 25.1327419 : f32
    %44 = vector.broadcast %cst_23 : f32 to vector<16x3xf32>
    %45 = arith.mulf %0, %44 : vector<16x3xf32>
    %cst_24 = arith.constant 1.57079637 : f32
    %46 = vector.broadcast %cst_24 : f32 to vector<16x3xf32>
    %47 = arith.addf %46, %45 : vector<16x3xf32>
    %48 = math.sin %47 : vector<16x3xf32>
    %c0_25 = arith.constant 0 : index
    %c24 = arith.constant 24 : index
    %49 = vector.load %arg2[%c0_25, %c24] : memref<16x39xf32, #tpu.memory_space<vmem>>, vector<16x3xf32>
    tpu.vector_store %arg2[%c0_25, %c24], %48 {strides = array<i32>} : memref<16x39xf32, #tpu.memory_space<vmem>>, vector<16x3xf32>,
    %cst_26 = arith.constant 50.2654839 : f32
    %50 = vector.broadcast %cst_26 : f32 to vector<16x3xf32>
    %51 = arith.mulf %0, %50 : vector<16x3xf32>
    %cst_27 = arith.constant 0.000000e+00 : f32
    %52 = vector.broadcast %cst_27 : f32 to vector<16x3xf32>
    %53 = arith.addf %52, %51 : vector<16x3xf32>
    %54 = math.sin %53 : vector<16x3xf32>
    %c0_28 = arith.constant 0 : index
    %c27 = arith.constant 27 : index
    %55 = vector.load %arg2[%c0_28, %c27] : memref<16x39xf32, #tpu.memory_space<vmem>>, vector<16x3xf32>
    tpu.vector_store %arg2[%c0_28, %c27], %54 {strides = array<i32>} : memref<16x39xf32, #tpu.memory_space<vmem>>, vector<16x3xf32>,
    %cst_29 = arith.constant 50.2654839 : f32
    %56 = vector.broadcast %cst_29 : f32 to vector<16x3xf32>
    %57 = arith.mulf %0, %56 : vector<16x3xf32>
    %cst_30 = arith.constant 1.57079637 : f32
    %58 = vector.broadcast %cst_30 : f32 to vector<16x3xf32>
    %59 = arith.addf %58, %57 : vector<16x3xf32>
    %60 = math.sin %59 : vector<16x3xf32>
    %c0_31 = arith.constant 0 : index
    %c30 = arith.constant 30 : index
    %61 = vector.load %arg2[%c0_31, %c30] : memref<16x39xf32, #tpu.memory_space<vmem>>, vector<16x3xf32>
    tpu.vector_store %arg2[%c0_31, %c30], %60 {strides = array<i32>} : memref<16x39xf32, #tpu.memory_space<vmem>>, vector<16x3xf32>,
    %cst_32 = arith.constant 100.530968 : f32
    %62 = vector.broadcast %cst_32 : f32 to vector<16x3xf32>
    %63 = arith.mulf %0, %62 : vector<16x3xf32>
    %cst_33 = arith.constant 0.000000e+00 : f32
    %64 = vector.broadcast %cst_33 : f32 to vector<16x3xf32>
    %65 = arith.addf %64, %63 : vector<16x3xf32>
    %66 = math.sin %65 : vector<16x3xf32>
    %c0_34 = arith.constant 0 : index
    %c33 = arith.constant 33 : index
    %67 = vector.load %arg2[%c0_34, %c33] : memref<16x39xf32, #tpu.memory_space<vmem>>, vector<16x3xf32>
    tpu.vector_store %arg2[%c0_34, %c33], %66 {strides = array<i32>} : memref<16x39xf32, #tpu.memory_space<vmem>>, vector<16x3xf32>,
    %cst_35 = arith.constant 100.530968 : f32
    %68 = vector.broadcast %cst_35 : f32 to vector<16x3xf32>
    %69 = arith.mulf %0, %68 : vector<16x3xf32>
    %cst_36 = arith.constant 1.57079637 : f32
    %70 = vector.broadcast %cst_36 : f32 to vector<16x3xf32>
    %71 = arith.addf %70, %69 : vector<16x3xf32>
    %72 = math.sin %71 : vector<16x3xf32>
    %c0_37 = arith.constant 0 : index
    %c36 = arith.constant 36 : index
    %73 = vector.load %arg2[%c0_37, %c36] : memref<16x39xf32, #tpu.memory_space<vmem>>, vector<16x3xf32>
    tpu.vector_store %arg2[%c0_37, %c36], %72 {strides = array<i32>} : memref<16x39xf32, #tpu.memory_space<vmem>>, vector<16x3xf32>,
    return
  }
  func.func @transform_0(%arg0: i32) -> (i32, i32) {
    %c0_i32 = arith.constant 0 : i32
    %c0_i32_0 = arith.constant 0 : i32
    return %arg0, %c0_i32 : i32, i32
  }
  func.func @transform_1(%arg0: i32) -> (i32, i32) {
    %c0_i32 = arith.constant 0 : i32
    %c0_i32_0 = arith.constant 0 : i32
    return %arg0, %c0_i32 : i32, i32
  }
}

</mosaic_0001>

<llo_original>
// kernel: tpu_custom_call.1
$region0: #{tpu_custom_call.1}
  #allocation0 [shape = 'u32[]', space=smem, size = 0x4, offset = 0x4, fixed_abs, tag = 'smem constant byte address 0x4 - core index']
  #allocation1 [shape = 'u32[144,128]{1,0:T(1,128)}', space=vmem, size = 0x12000, scoped, tag = 'internal scratch']
  %s0 = inlined_call_operand.vmem [shape: f32[16,3], index: 0, kind: input, shape index: {}]
  %s1 = inlined_call_operand.hbm [shape: f32[16,39], index: 1, kind: output, shape index: {}]
  %s2 = sld [smem:[#allocation0]]
  $region14: #{tpu_custom_call.1} parent=0
    _
  %s4 = ssub.s32 1, %s2
  %s5 = scalar_select 0, %s4, %s2
  $region1: #{tpu_custom_call.1} parent=0
    #allocation2 [shape = 'u8[8192]{0}', space=vmem, size = 0x2000, scoped, tag = 'output window, operand 0, single buffered']
    #allocation3 [shape = 's32[1]{0}', space=sflag, size = 0x4, scoped, tag = 'scoped memory for tpu_custom_call.1']
    %6 = vsyncpa [#allocation3], 0
    // Predicated region
    $region2: #{tpu_custom_call.1} parent=1 // pred_check
      _
    $region3: #{tpu_custom_call.1} parent=1 // pred_check_branch
      %8 = sbr.rel (0) target = $region5
    $region4: #{tpu_custom_call.1} parent=1 // pred_region
      _
    $region5: #{tpu_custom_call.1} parent=1 // pred_fallthru
      _
    %v9 = vld [vmem:[%s0] sm:$0xff]
    %v10 = vld [vmem:[%s0 + $0x8] sm:$0xff]
    %vm11 = vcmask 23552
    %12 = vst.msk [vmem:[#allocation2] sm:$0xff] %vm11, %v9
    %13 = vst.msk [vmem:[#allocation2 + $0x8] sm:$0xff] %vm11, %v10
    %v14 = vmul.f32 %v9, 3.1415927
    %v15 = vmul.f32 %v10, 3.1415927
    %v16 = vadd.f32 %v14, 0.0
    %v17 = vadd.f32 %v15, 0.0
    %v18 = vand.u32 2147483647, %v16
    %vm19 = vcmp.le.f32.partialorder %v18, 0.7853982
    %vm20 = vcmp.lt.s32.totalorder %v16, 0
    %v21 = vand.u32 %v16, 2139095040
    %v22 = vshrl.u32 %v21, 23
    %v23 = vsub.s32 %v22, 127
    %v24 = vand.u32 2147483647, %v16
    %v25 = vand.u32 %v24, 8388607
    %v26 = vor.u32 %v25, 8388608
    %v27 = vsub.s32 0, %v26
    %v28 = vadd.s32 %v23, 1
    %vm29 = vcmp.gt.s32.totalorder %v28, 0
    %v30 = vsel %vm29, %v28, 0
    %v31 = vshrl.u32 %v30, 5
    %v32 = vand.u32 %v30, 31
    %v33 = vsub.s32 32, %v32
    %v34 = vshrl.u32 683565275, %v33
    %v35 = vshll.u32 683565275, %v32
    %v36 = vshrl.u32 2475754826, %v33
    %v37 = vor.u32 %v35, %v36
    %v38 = vshll.u32 2475754826, %v32
    %v39 = vshrl.u32 2131351028, %v33
    %v40 = vor.u32 %v38, %v39
    %v41 = vshll.u32 2131351028, %v32
    %v42 = vshrl.u32 2102212464, %v33
    %v43 = vor.u32 %v41, %v42
    %v44 = vshll.u32 2102212464, %v32
    %v45 = vshrl.u32 920167782, %v33
    %v46 = vor.u32 %v44, %v45
    %v47 = vshll.u32 920167782, %v32
    %v48 = vshrl.u32 1326507024, %v33
    %v49 = vor.u32 %v47, %v48
    %vm50 = vcmp.lt.s32.totalorder %v31, 1
    %vm51 = vcmp.lt.s32.totalorder %v31, 2
    %vm52 = vcmp.lt.s32.totalorder %v31, 3
    %vm53 = vcmp.lt.s32.totalorder %v31, 4
    %v54 = vsel %vm50, %v34, %v37
    %v55 = vsel %vm53, %v43, 2102212464
    %v56 = vsel %vm52, %v40, %v55
    %v57 = vsel %vm51, %v54, %v56
    %v58 = vsel %vm50, %v37, %v40
    %v59 = vsel %vm53, %v46, 920167782
    %v60 = vsel %vm52, %v43, %v59
    %v61 = vsel %vm51, %v58, %v60
    %v62 = vsel %vm50, %v40, %v43
    %v63 = vsel %vm53, %v49, 1326507024
    %v64 = vsel %vm52, %v46, %v63
    %v65 = vsel %vm51, %v62, %v64
    %v66 = vshll.u32 %v26, 8
    %v67 = vmul.u32.u64.compose %v66, %v65
    %v68 = vextract.low.u32 %v67
    %v69 = vextract.high.u32 %v67
    %v70 = vmul.u32.u64.compose %v66, %v61
    %v71 = vextract.low.u32 %v70
    %v72 = vextract.high.u32 %v70
    %v73 = vmul.u32 %v66, %v57
    %v74 = vadd.s32 %v69, %v71
    %vm75 = vc.u32 %v69, %v71
    %v76 = vadd.s32 %v72, 1
    %v77 = vsel %vm75, %v76, %v72
    %v78 = vadd.s32 %v73, %v77
    %v79 = vadd.s32 %v78, 536870912
    %v80 = vshrl.u32 %v79, 30
    %v81 = vshll.u32 %v80, 30
    %v82 = vsub.s32 %v78, %v81
    %vm83 = vcmp.lt.s32.totalorder %v82, 0
    %v84 = vsub.s32 0, %v82
    %v85 = vsel %vm83, %v84, %v82
    %v86 = vclz %v85
    %v87 = vsub.s32 %v86, 2
    %vm88 = vcmp.gt.s32.totalorder 0, %v87
    %v89 = vsel %vm88, 0, %v87
    %v90 = vsub.s32 32, %v89
    %v91 = vshll.u32 %v82, %v89
    %v92 = vshrl.u32 %v74, %v90
    %v93 = vor.u32 %v91, %v92
    %v94 = vsub.s32 4294967266, %v89
    %v95 = vadd.s32 %v94, 127
    %v96 = vshll.u32 %v95, 23
    %v97 = vor.u32 4788187, %v96
    %v98 = vand.u32 2147483647, %v97
    %v100 = vcvt.s32.f32 %v93
    %v101 = vmul.f32 %v100, %v98
    %v102 = vxor.u32 %v101, 2147483648
    %v103 = vsel %vm20, %v102, %v101
    %v104 = vsub.s32 4, %v80
    %v105 = vsel %vm20, %v104, %v80
    %v106 = vsel %vm19, %v16, %v103
    %v107 = vsel %vm19, 0, %v105
    %v108 = vcosq.f32.pop %v106
    %v109 = vsinq.f32.pop %v106
    %vm110 = vweird.f32 %v16
    %v111 = vadd.s32 %v107, 3
    %v112 = vand.u32 %v111, 3
    %vm113 = vcmp.lt.s32.totalorder %v112, 2
    %vm114 = vcmp.eq.s32.totalorder %v112, 0
    %v115 = vxor.u32 %v109, 2147483648
    %v116 = vsel %vm114, %v108, %v115
    %vm117 = vcmp.eq.s32.totalorder %v112, 2
    %v118 = vxor.u32 %v108, 2147483648
    %v119 = vsel %vm117, %v118, %v109
    %v120 = vsel %vm113, %v116, %v119
    %v121 = vsel %vm110, nan, %v120
    %v122 = vand.u32 2147483647, %v17
    %vm123 = vcmp.le.f32.partialorder %v122, 0.7853982
    %vm124 = vcmp.lt.s32.totalorder %v17, 0
    %v125 = vand.u32 %v17, 2139095040
    %v126 = vshrl.u32 %v125, 23
    %v127 = vsub.s32 %v126, 127
    %v128 = vand.u32 2147483647, %v17
    %v129 = vand.u32 %v128, 8388607
    %v130 = vor.u32 %v129, 8388608
    %v131 = vsub.s32 0, %v130
    %v132 = vadd.s32 %v127, 1
    %vm133 = vcmp.gt.s32.totalorder %v132, 0
    %v134 = vsel %vm133, %v132, 0
    %v135 = vshrl.u32 %v134, 5
    %v136 = vand.u32 %v134, 31
    %v137 = vsub.s32 32, %v136
    %v138 = vshrl.u32 683565275, %v137
    %v139 = vshll.u32 683565275, %v136
    %v140 = vshrl.u32 2475754826, %v137
    %v141 = vor.u32 %v139, %v140
    %v142 = vshll.u32 2475754826, %v136
    %v143 = vshrl.u32 2131351028, %v137
    %v144 = vor.u32 %v142, %v143
    %v145 = vshll.u32 2131351028, %v136
    %v146 = vshrl.u32 2102212464, %v137
    %v147 = vor.u32 %v145, %v146
    %v148 = vshll.u32 2102212464, %v136
    %v149 = vshrl.u32 920167782, %v137
    %v150 = vor.u32 %v148, %v149
    %v151 = vshll.u32 920167782, %v136
    %v152 = vshrl.u32 1326507024, %v137
    %v153 = vor.u32 %v151, %v152
    %vm154 = vcmp.lt.s32.totalorder %v135, 1
    %vm155 = vcmp.lt.s32.totalorder %v135, 2
    %vm156 = vcmp.lt.s32.totalorder %v135, 3
    %vm157 = vcmp.lt.s32.totalorder %v135, 4
    %v158 = vsel %vm154, %v138, %v141
    %v159 = vsel %vm157, %v147, 2102212464
    %v160 = vsel %vm156, %v144, %v159
    %v161 = vsel %vm155, %v158, %v160
    %v162 = vsel %vm154, %v141, %v144
    %v163 = vsel %vm157, %v150, 920167782
    %v164 = vsel %vm156, %v147, %v163
    %v165 = vsel %vm155, %v162, %v164
    %v166 = vsel %vm154, %v144, %v147
    %v167 = vsel %vm157, %v153, 1326507024
    %v168 = vsel %vm156, %v150, %v167
    %v169 = vsel %vm155, %v166, %v168
    %v170 = vshll.u32 %v130, 8
    %v171 = vmul.u32.u64.compose %v170, %v169
    %v172 = vextract.low.u32 %v171
    %v173 = vextract.high.u32 %v171
    %v174 = vmul.u32.u64.compose %v170, %v165
    %v175 = vextract.low.u32 %v174
    %v176 = vextract.high.u32 %v174
    %v177 = vmul.u32 %v170, %v161
    %v178 = vadd.s32 %v173, %v175
    %vm179 = vc.u32 %v173, %v175
    %v180 = vadd.s32 %v176, 1
    %v181 = vsel %vm179, %v180, %v176
    %v182 = vadd.s32 %v177, %v181
    %v183 = vadd.s32 %v182, 536870912
    %v184 = vshrl.u32 %v183, 30
    %v185 = vshll.u32 %v184, 30
    %v186 = vsub.s32 %v182, %v185
    %vm187 = vcmp.lt.s32.totalorder %v186, 0
    %v188 = vsub.s32 0, %v186
    %v189 = vsel %vm187, %v188, %v186
    %v190 = vclz %v189
    %v191 = vsub.s32 %v190, 2
    %vm192 = vcmp.gt.s32.totalorder 0, %v191
    %v193 = vsel %vm192, 0, %v191
    %v194 = vsub.s32 32, %v193
    %v195 = vshll.u32 %v186, %v193
    %v196 = vshrl.u32 %v178, %v194
    %v197 = vor.u32 %v195, %v196
    %v198 = vsub.s32 4294967266, %v193
    %v199 = vadd.s32 %v198, 127
    %v200 = vshll.u32 %v199, 23
    %v201 = vor.u32 4788187, %v200
    %v202 = vand.u32 2147483647, %v201
    %v204 = vcvt.s32.f32 %v197
    %v205 = vmul.f32 %v204, %v202
    %v206 = vxor.u32 %v205, 2147483648
    %v207 = vsel %vm124, %v206, %v205
    %v208 = vsub.s32 4, %v184
    %v209 = vsel %vm124, %v208, %v184
    %v210 = vsel %vm123, %v17, %v207
    %v211 = vsel %vm123, 0, %v209
    %v212 = vcosq.f32.pop %v210
    %v213 = vsinq.f32.pop %v210
    %vm214 = vweird.f32 %v17
    %v215 = vadd.s32 %v211, 3
    %v216 = vand.u32 %v215, 3
    %vm217 = vcmp.lt.s32.totalorder %v216, 2
    %vm218 = vcmp.eq.s32.totalorder %v216, 0
    %v219 = vxor.u32 %v213, 2147483648
    %v220 = vsel %vm218, %v212, %v219
    %vm221 = vcmp.eq.s32.totalorder %v216, 2
    %v222 = vxor.u32 %v212, 2147483648
    %v223 = vsel %vm221, %v222, %v213
    %v224 = vsel %vm217, %v220, %v223
    %v225 = vsel %vm214, nan, %v224
    %228 = vrot.lane.b32.xlu0 %v121, 3
    %v229 = vpop.permute.xlu0 %228
    %230 = vrot.lane.b32.xlu0 %v225, 3
    %v231 = vpop.permute.xlu0 %230
    %vm234 = vcmask 48152
    %235 = vst.msk [vmem:[#allocation2] sm:$0xff] %vm234, %v229
    %236 = vst.msk [vmem:[#allocation2 + $0x8] sm:$0xff] %vm234, %v231
    %v237 = vadd.f32 %v14, 1.5707964
    %v238 = vadd.f32 %v15, 1.5707964
    %v239 = vand.u32 2147483647, %v237
    %vm240 = vcmp.le.f32.partialorder %v239, 0.7853982
    %vm241 = vcmp.lt.s32.totalorder %v237, 0
    %v242 = vand.u32 %v237, 2139095040
    %v243 = vshrl.u32 %v242, 23
    %v244 = vsub.s32 %v243, 127
    %v245 = vand.u32 2147483647, %v237
    %v246 = vand.u32 %v245, 8388607
    %v247 = vor.u32 %v246, 8388608
    %v248 = vsub.s32 0, %v247
    %v249 = vadd.s32 %v244, 1
    %vm250 = vcmp.gt.s32.totalorder %v249, 0
    %v251 = vsel %vm250, %v249, 0
    %v252 = vshrl.u32 %v251, 5
    %v253 = vand.u32 %v251, 31
    %v254 = vsub.s32 32, %v253
    %v255 = vshrl.u32 683565275, %v254
    %v256 = vshll.u32 683565275, %v253
    %v257 = vshrl.u32 2475754826, %v254
    %v258 = vor.u32 %v256, %v257
    %v259 = vshll.u32 2475754826, %v253
    %v260 = vshrl.u32 2131351028, %v254
    %v261 = vor.u32 %v259, %v260
    %v262 = vshll.u32 2131351028, %v253
    %v263 = vshrl.u32 2102212464, %v254
    %v264 = vor.u32 %v262, %v263
    %v265 = vshll.u32 2102212464, %v253
    %v266 = vshrl.u32 920167782, %v254
    %v267 = vor.u32 %v265, %v266
    %v268 = vshll.u32 920167782, %v253
    %v269 = vshrl.u32 1326507024, %v254
    %v270 = vor.u32 %v268, %v269
    %vm271 = vcmp.lt.s32.totalorder %v252, 1
    %vm272 = vcmp.lt.s32.totalorder %v252, 2
    %vm273 = vcmp.lt.s32.totalorder %v252, 3
    %vm274 = vcmp.lt.s32.totalorder %v252, 4
    %v275 = vsel %vm271, %v255, %v258
    %v276 = vsel %vm274, %v264, 2102212464
    %v277 = vsel %vm273, %v261, %v276
    %v278 = vsel %vm272, %v275, %v277
    %v279 = vsel %vm271, %v258, %v261
    %v280 = vsel %vm274, %v267, 920167782
    %v281 = vsel %vm273, %v264, %v280
    %v282 = vsel %vm272, %v279, %v281
    %v283 = vsel %vm271, %v261, %v264
    %v284 = vsel %vm274, %v270, 1326507024
    %v285 = vsel %vm273, %v267, %v284
    %v286 = vsel %vm272, %v283, %v285
    %v287 = vshll.u32 %v247, 8
    %v288 = vmul.u32.u64.compose %v287, %v286
    %v289 = vextract.low.u32 %v288
    %v290 = vextract.high.u32 %v288
    %v291 = vmul.u32.u64.compose %v287, %v282
    %v292 = vextract.low.u32 %v291
    %v293 = vextract.high.u32 %v291
    %v294 = vmul.u32 %v287, %v278
    %v295 = vadd.s32 %v290, %v292
    %vm296 = vc.u32 %v290, %v292
    %v297 = vadd.s32 %v293, 1
    %v298 = vsel %vm296, %v297, %v293
    %v299 = vadd.s32 %v294, %v298
    %v300 = vadd.s32 %v299, 536870912
    %v301 = vshrl.u32 %v300, 30
    %v302 = vshll.u32 %v301, 30
    %v303 = vsub.s32 %v299, %v302
    %vm304 = vcmp.lt.s32.totalorder %v303, 0
    %v305 = vsub.s32 0, %v303
    %v306 = vsel %vm304, %v305, %v303
    %v307 = vclz %v306
    %v308 = vsub.s32 %v307, 2
    %vm309 = vcmp.gt.s32.totalorder 0, %v308
    %v310 = vsel %vm309, 0, %v308
    %v311 = vsub.s32 32, %v310
    %v312 = vshll.u32 %v303, %v310
    %v313 = vshrl.u32 %v295, %v311
    %v314 = vor.u32 %v312, %v313
    %v315 = vsub.s32 4294967266, %v310
    %v316 = vadd.s32 %v315, 127
    %v317 = vshll.u32 %v316, 23
    %v318 = vor.u32 4788187, %v317
    %v319 = vand.u32 2147483647, %v318
    %v321 = vcvt.s32.f32 %v314
    %v322 = vmul.f32 %v321, %v319
    %v323 = vxor.u32 %v322, 2147483648
    %v324 = vsel %vm241, %v323, %v322
    %v325 = vsub.s32 4, %v301
    %v326 = vsel %vm241, %v325, %v301
    %v327 = vsel %vm240, %v237, %v324
    %v328 = vsel %vm240, 0, %v326
    %v329 = vcosq.f32.pop %v327
    %v330 = vsinq.f32.pop %v327
    %vm331 = vweird.f32 %v237
    %v332 = vadd.s32 %v328, 3
    %v333 = vand.u32 %v332, 3
    %vm334 = vcmp.lt.s32.totalorder %v333, 2
    %vm335 = vcmp.eq.s32.totalorder %v333, 0
    %v336 = vxor.u32 %v330, 2147483648
    %v337 = vsel %vm335, %v329, %v336
    %vm338 = vcmp.eq.s32.totalorder %v333, 2
    %v339 = vxor.u32 %v329, 2147483648
    %v340 = vsel %vm338, %v339, %v330
    %v341 = vsel %vm334, %v337, %v340
    %v342 = vsel %vm331, nan, %v341
    %v343 = vand.u32 2147483647, %v238
    %vm344 = vcmp.le.f32.partialorder %v343, 0.7853982
    %vm345 = vcmp.lt.s32.totalorder %v238, 0
    %v346 = vand.u32 %v238, 2139095040
    %v347 = vshrl.u32 %v346, 23
    %v348 = vsub.s32 %v347, 127
    %v349 = vand.u32 2147483647, %v238
    %v350 = vand.u32 %v349, 8388607
    %v351 = vor.u32 %v350, 8388608
    %v352 = vsub.s32 0, %v351
    %v353 = vadd.s32 %v348, 1
    %vm354 = vcmp.gt.s32.totalorder %v353, 0
    %v355 = vsel %vm354, %v353, 0
    %v356 = vshrl.u32 %v355, 5
    %v357 = vand.u32 %v355, 31
    %v358 = vsub.s32 32, %v357
    %v359 = vshrl.u32 683565275, %v358
    %v360 = vshll.u32 683565275, %v357
    %v361 = vshrl.u32 2475754826, %v358
    %v362 = vor.u32 %v360, %v361
    %v363 = vshll.u32 2475754826, %v357
    %v364 = vshrl.u32 2131351028, %v358
    %v365 = vor.u32 %v363, %v364
    %v366 = vshll.u32 2131351028, %v357
    %v367 = vshrl.u32 2102212464, %v358
    %v368 = vor.u32 %v366, %v367
    %v369 = vshll.u32 2102212464, %v357
    %v370 = vshrl.u32 920167782, %v358
    %v371 = vor.u32 %v369, %v370
    %v372 = vshll.u32 920167782, %v357
    %v373 = vshrl.u32 1326507024, %v358
    %v374 = vor.u32 %v372, %v373
    %vm375 = vcmp.lt.s32.totalorder %v356, 1
    %vm376 = vcmp.lt.s32.totalorder %v356, 2
    %vm377 = vcmp.lt.s32.totalorder %v356, 3
    %vm378 = vcmp.lt.s32.totalorder %v356, 4
    %v379 = vsel %vm375, %v359, %v362
    %v380 = vsel %vm378, %v368, 2102212464
    %v381 = vsel %vm377, %v365, %v380
    %v382 = vsel %vm376, %v379, %v381
    %v383 = vsel %vm375, %v362, %v365
    %v384 = vsel %vm378, %v371, 920167782
    %v385 = vsel %vm377, %v368, %v384
    %v386 = vsel %vm376, %v383, %v385
    %v387 = vsel %vm375, %v365, %v368
    %v388 = vsel %vm378, %v374, 1326507024
    %v389 = vsel %vm377, %v371, %v388
    %v390 = vsel %vm376, %v387, %v389
    %v391 = vshll.u32 %v351, 8
    %v392 = vmul.u32.u64.compose %v391, %v390
    %v393 = vextract.low.u32 %v392
    %v394 = vextract.high.u32 %v392
    %v395 = vmul.u32.u64.compose %v391, %v386
    %v396 = vextract.low.u32 %v395
    %v397 = vextract.high.u32 %v395
    %v398 = vmul.u32 %v391, %v382
    %v399 = vadd.s32 %v394, %v396
    %vm400 = vc.u32 %v394, %v396
    %v401 = vadd.s32 %v397, 1
    %v402 = vsel %vm400, %v401, %v397
    %v403 = vadd.s32 %v398, %v402
    %v404 = vadd.s32 %v403, 536870912
    %v405 = vshrl.u32 %v404, 30
    %v406 = vshll.u32 %v405, 30
    %v407 = vsub.s32 %v403, %v406
    %vm408 = vcmp.lt.s32.totalorder %v407, 0
    %v409 = vsub.s32 0, %v407
    %v410 = vsel %vm408, %v409, %v407
    %v411 = vclz %v410
    %v412 = vsub.s32 %v411, 2
    %vm413 = vcmp.gt.s32.totalorder 0, %v412
    %v414 = vsel %vm413, 0, %v412
    %v415 = vsub.s32 32, %v414
    %v416 = vshll.u32 %v407, %v414
    %v417 = vshrl.u32 %v399, %v415
    %v418 = vor.u32 %v416, %v417
    %v419 = vsub.s32 4294967266, %v414
    %v420 = vadd.s32 %v419, 127
    %v421 = vshll.u32 %v420, 23
    %v422 = vor.u32 4788187, %v421
    %v423 = vand.u32 2147483647, %v422
    %v425 = vcvt.s32.f32 %v418
    %v426 = vmul.f32 %v425, %v423
    %v427 = vxor.u32 %v426, 2147483648
    %v428 = vsel %vm345, %v427, %v426
    %v429 = vsub.s32 4, %v405
    %v430 = vsel %vm345, %v429, %v405
    %v431 = vsel %vm344, %v238, %v428
    %v432 = vsel %vm344, 0, %v430
    %v433 = vcosq.f32.pop %v431
    %v434 = vsinq.f32.pop %v431
    %vm435 = vweird.f32 %v238
    %v436 = vadd.s32 %v432, 3
    %v437 = vand.u32 %v436, 3
    %vm438 = vcmp.lt.s32.totalorder %v437, 2
    %vm439 = vcmp.eq.s32.totalorder %v437, 0
    %v440 = vxor.u32 %v434, 2147483648
    %v441 = vsel %vm439, %v433, %v440
    %vm442 = vcmp.eq.s32.totalorder %v437, 2
    %v443 = vxor.u32 %v433, 2147483648
    %v444 = vsel %vm442, %v443, %v434
    %v445 = vsel %vm438, %v441, %v444
    %v446 = vsel %vm435, nan, %v445
    %449 = vrot.lane.b32.xlu0 %v342, 6
    %v450 = vpop.permute.xlu0 %449
    %451 = vrot.lane.b32.xlu0 %v446, 6
    %v452 = vpop.permute.xlu0 %451
    %vm455 = vcmask 72752
    %456 = vst.msk [vmem:[#allocation2] sm:$0xff] %vm455, %v450
    %457 = vst.msk [vmem:[#allocation2 + $0x8] sm:$0xff] %vm455, %v452
    %v458 = vmul.f32 %v9, 6.2831855
    %v459 = vmul.f32 %v10, 6.2831855
    %v460 = vadd.f32 %v458, 0.0
    %v461 = vadd.f32 %v459, 0.0
    %v462 = vand.u32 2147483647, %v460
    %vm463 = vcmp.le.f32.partialorder %v462, 0.7853982
    %vm464 = vcmp.lt.s32.totalorder %v460, 0
    %v465 = vand.u32 %v460, 2139095040
    %v466 = vshrl.u32 %v465, 23
    %v467 = vsub.s32 %v466, 127
    %v468 = vand.u32 2147483647, %v460
    %v469 = vand.u32 %v468, 8388607
    %v470 = vor.u32 %v469, 8388608
    %v471 = vsub.s32 0, %v470
    %v472 = vadd.s32 %v467, 1
    %vm473 = vcmp.gt.s32.totalorder %v472, 0
    %v474 = vsel %vm473, %v472, 0
    %v475 = vshrl.u32 %v474, 5
    %v476 = vand.u32 %v474, 31
    %v477 = vsub.s32 32, %v476
    %v478 = vshrl.u32 683565275, %v477
    %v479 = vshll.u32 683565275, %v476
    %v480 = vshrl.u32 2475754826, %v477
    %v481 = vor.u32 %v479, %v480
    %v482 = vshll.u32 2475754826, %v476
    %v483 = vshrl.u32 2131351028, %v477
    %v484 = vor.u32 %v482, %v483
    %v485 = vshll.u32 2131351028, %v476
    %v486 = vshrl.u32 2102212464, %v477
    %v487 = vor.u32 %v485, %v486
    %v488 = vshll.u32 2102212464, %v476
    %v489 = vshrl.u32 920167782, %v477
    %v490 = vor.u32 %v488, %v489
    %v491 = vshll.u32 920167782, %v476
    %v492 = vshrl.u32 1326507024, %v477
    %v493 = vor.u32 %v491, %v492
    %vm494 = vcmp.lt.s32.totalorder %v475, 1
    %vm495 = vcmp.lt.s32.totalorder %v475, 2
    %vm496 = vcmp.lt.s32.totalorder %v475, 3
    %vm497 = vcmp.lt.s32.totalorder %v475, 4
    %v498 = vsel %vm494, %v478, %v481
    %v499 = vsel %vm497, %v487, 2102212464
    %v500 = vsel %vm496, %v484, %v499
    %v501 = vsel %vm495, %v498, %v500
    %v502 = vsel %vm494, %v481, %v484
    %v503 = vsel %vm497, %v490, 920167782
    %v504 = vsel %vm496, %v487, %v503
    %v505 = vsel %vm495, %v502, %v504
    %v506 = vsel %vm494, %v484, %v487
    %v507 = vsel %vm497, %v493, 1326507024
    %v508 = vsel %vm496, %v490, %v507
    %v509 = vsel %vm495, %v506, %v508
    %v510 = vshll.u32 %v470, 8
    %v511 = vmul.u32.u64.compose %v510, %v509
    %v512 = vextract.low.u32 %v511
    %v513 = vextract.high.u32 %v511
    %v514 = vmul.u32.u64.compose %v510, %v505
    %v515 = vextract.low.u32 %v514
    %v516 = vextract.high.u32 %v514
    %v517 = vmul.u32 %v510, %v501
    %v518 = vadd.s32 %v513, %v515
    %vm519 = vc.u32 %v513, %v515
    %v520 = vadd.s32 %v516, 1
    %v521 = vsel %vm519, %v520, %v516
    %v522 = vadd.s32 %v517, %v521
    %v523 = vadd.s32 %v522, 536870912
    %v524 = vshrl.u32 %v523, 30
    %v525 = vshll.u32 %v524, 30
    %v526 = vsub.s32 %v522, %v525
    %vm527 = vcmp.lt.s32.totalorder %v526, 0
    %v528 = vsub.s32 0, %v526
    %v529 = vsel %vm527, %v528, %v526
    %v530 = vclz %v529
    %v531 = vsub.s32 %v530, 2
    %vm532 = vcmp.gt.s32.totalorder 0, %v531
    %v533 = vsel %vm532, 0, %v531
    %v534 = vsub.s32 32, %v533
    %v535 = vshll.u32 %v526, %v533
    %v536 = vshrl.u32 %v518, %v534
    %v537 = vor.u32 %v535, %v536
    %v538 = vsub.s32 4294967266, %v533
    %v539 = vadd.s32 %v538, 127
    %v540 = vshll.u32 %v539, 23
    %v541 = vor.u32 4788187, %v540
    %v542 = vand.u32 2147483647, %v541
    %v544 = vcvt.s32.f32 %v537
    %v545 = vmul.f32 %v544, %v542
    %v546 = vxor.u32 %v545, 2147483648
    %v547 = vsel %vm464, %v546, %v545
    %v548 = vsub.s32 4, %v524
    %v549 = vsel %vm464, %v548, %v524
    %v550 = vsel %vm463, %v460, %v547
    %v551 = vsel %vm463, 0, %v549
    %v552 = vcosq.f32.pop %v550
    %v553 = vsinq.f32.pop %v550
    %vm554 = vweird.f32 %v460
    %v555 = vadd.s32 %v551, 3
    %v556 = vand.u32 %v555, 3
    %vm557 = vcmp.lt.s32.totalorder %v556, 2
    %vm558 = vcmp.eq.s32.totalorder %v556, 0
    %v559 = vxor.u32 %v553, 2147483648
    %v560 = vsel %vm558, %v552, %v559
    %vm561 = vcmp.eq.s32.totalorder %v556, 2
    %v562 = vxor.u32 %v552, 2147483648
    %v563 = vsel %vm561, %v562, %v553
    %v564 = vsel %vm557, %v560, %v563
    %v565 = vsel %vm554, nan, %v564
    %v566 = vand.u32 2147483647, %v461
    %vm567 = vcmp.le.f32.partialorder %v566, 0.7853982
    %vm568 = vcmp.lt.s32.totalorder %v461, 0
    %v569 = vand.u32 %v461, 2139095040
    %v570 = vshrl.u32 %v569, 23
    %v571 = vsub.s32 %v570, 127
    %v572 = vand.u32 2147483647, %v461
    %v573 = vand.u32 %v572, 8388607
    %v574 = vor.u32 %v573, 8388608
    %v575 = vsub.s32 0, %v574
    %v576 = vadd.s32 %v571, 1
    %vm577 = vcmp.gt.s32.totalorder %v576, 0
    %v578 = vsel %vm577, %v576, 0
    %v579 = vshrl.u32 %v578, 5
    %v580 = vand.u32 %v578, 31
    %v581 = vsub.s32 32, %v580
    %v582 = vshrl.u32 683565275, %v581
    %v583 = vshll.u32 683565275, %v580
    %v584 = vshrl.u32 2475754826, %v581
    %v585 = vor.u32 %v583, %v584
    %v586 = vshll.u32 2475754826, %v580
    %v587 = vshrl.u32 2131351028, %v581
    %v588 = vor.u32 %v586, %v587
    %v589 = vshll.u32 2131351028, %v580
    %v590 = vshrl.u32 2102212464, %v581
    %v591 = vor.u32 %v589, %v590
    %v592 = vshll.u32 2102212464, %v580
    %v593 = vshrl.u32 920167782, %v581
    %v594 = vor.u32 %v592, %v593
    %v595 = vshll.u32 920167782, %v580
    %v596 = vshrl.u32 1326507024, %v581
    %v597 = vor.u32 %v595, %v596
    %vm598 = vcmp.lt.s32.totalorder %v579, 1
    %vm599 = vcmp.lt.s32.totalorder %v579, 2
    %vm600 = vcmp.lt.s32.totalorder %v579, 3
    %vm601 = vcmp.lt.s32.totalorder %v579, 4
    %v602 = vsel %vm598, %v582, %v585
    %v603 = vsel %vm601, %v591, 2102212464
    %v604 = vsel %vm600, %v588, %v603
    %v605 = vsel %vm599, %v602, %v604
    %v606 = vsel %vm598, %v585, %v588
    %v607 = vsel %vm601, %v594, 920167782
    %v608 = vsel %vm600, %v591, %v607
    %v609 = vsel %vm599, %v606, %v608
    %v610 = vsel %vm598, %v588, %v591
    %v611 = vsel %vm601, %v597, 1326507024
    %v612 = vsel %vm600, %v594, %v611
    %v613 = vsel %vm599, %v610, %v612
    %v614 = vshll.u32 %v574, 8
    %v615 = vmul.u32.u64.compose %v614, %v613
    %v616 = vextract.low.u32 %v615
    %v617 = vextract.high.u32 %v615
    %v618 = vmul.u32.u64.compose %v614, %v609
    %v619 = vextract.low.u32 %v618
    %v620 = vextract.high.u32 %v618
    %v621 = vmul.u32 %v614, %v605
    %v622 = vadd.s32 %v617, %v619
    %vm623 = vc.u32 %v617, %v619
    %v624 = vadd.s32 %v620, 1
    %v625 = vsel %vm623, %v624, %v620
    %v626 = vadd.s32 %v621, %v625
    %v627 = vadd.s32 %v626, 536870912
    %v628 = vshrl.u32 %v627, 30
    %v629 = vshll.u32 %v628, 30
    %v630 = vsub.s32 %v626, %v629
    %vm631 = vcmp.lt.s32.totalorder %v630, 0
    %v632 = vsub.s32 0, %v630
    %v633 = vsel %vm631, %v632, %v630
    %v634 = vclz %v633
    %v635 = vsub.s32 %v634, 2
    %vm636 = vcmp.gt.s32.totalorder 0, %v635
    %v637 = vsel %vm636, 0, %v635
    %v638 = vsub.s32 32, %v637
    %v639 = vshll.u32 %v630, %v637
    %v640 = vshrl.u32 %v622, %v638
    %v641 = vor.u32 %v639, %v640
    %v642 = vsub.s32 4294967266, %v637
    %v643 = vadd.s32 %v642, 127
    %v644 = vshll.u32 %v643, 23
    %v645 = vor.u32 4788187, %v644
    %v646 = vand.u32 2147483647, %v645
    %v648 = vcvt.s32.f32 %v641
    %v649 = vmul.f32 %v648, %v646
    %v650 = vxor.u32 %v649, 2147483648
    %v651 = vsel %vm568, %v650, %v649
    %v652 = vsub.s32 4, %v628
    %v653 = vsel %vm568, %v652, %v628
    %v654 = vsel %vm567, %v461, %v651
    %v655 = vsel %vm567, 0, %v653
    %v656 = vcosq.f32.pop %v654
    %v657 = vsinq.f32.pop %v654
    %vm658 = vweird.f32 %v461
    %v659 = vadd.s32 %v655, 3
    %v660 = vand.u32 %v659, 3
    %vm661 = vcmp.lt.s32.totalorder %v660, 2
    %vm662 = vcmp.eq.s32.totalorder %v660, 0
    %v663 = vxor.u32 %v657, 2147483648
    %v664 = vsel %vm662, %v656, %v663
    %vm665 = vcmp.eq.s32.totalorder %v660, 2
    %v666 = vxor.u32 %v656, 2147483648
    %v667 = vsel %vm665, %v666, %v657
    %v668 = vsel %vm661, %v664, %v667
    %v669 = vsel %vm658, nan, %v668
    %672 = vrot.lane.b32.xlu0 %v565, 9
    %v673 = vpop.permute.xlu0 %672
    %674 = vrot.lane.b32.xlu0 %v669, 9
    %v675 = vpop.permute.xlu0 %674
    %vm678 = vcmask 97352
    %679 = vst.msk [vmem:[#allocation2] sm:$0xff] %vm678, %v673
    %680 = vst.msk [vmem:[#allocation2 + $0x8] sm:$0xff] %vm678, %v675
    %v681 = vadd.f32 %v458, 1.5707964
    %v682 = vadd.f32 %v459, 1.5707964
    %v683 = vand.u32 2147483647, %v681
    %vm684 = vcmp.le.f32.partialorder %v683, 0.7853982
    %vm685 = vcmp.lt.s32.totalorder %v681, 0
    %v686 = vand.u32 %v681, 2139095040
    %v687 = vshrl.u32 %v686, 23
    %v688 = vsub.s32 %v687, 127
    %v689 = vand.u32 2147483647, %v681
    %v690 = vand.u32 %v689, 8388607
    %v691 = vor.u32 %v690, 8388608
    %v692 = vsub.s32 0, %v691
    %v693 = vadd.s32 %v688, 1
    %vm694 = vcmp.gt.s32.totalorder %v693, 0
    %v695 = vsel %vm694, %v693, 0
    %v696 = vshrl.u32 %v695, 5
    %v697 = vand.u32 %v695, 31
    %v698 = vsub.s32 32, %v697
    %v699 = vshrl.u32 683565275, %v698
    %v700 = vshll.u32 683565275, %v697
    %v701 = vshrl.u32 2475754826, %v698
    %v702 = vor.u32 %v700, %v701
    %v703 = vshll.u32 2475754826, %v697
    %v704 = vshrl.u32 2131351028, %v698
    %v705 = vor.u32 %v703, %v704
    %v706 = vshll.u32 2131351028, %v697
    %v707 = vshrl.u32 2102212464, %v698
    %v708 = vor.u32 %v706, %v707
    %v709 = vshll.u32 2102212464, %v697
    %v710 = vshrl.u32 920167782, %v698
    %v711 = vor.u32 %v709, %v710
    %v712 = vshll.u32 920167782, %v697
    %v713 = vshrl.u32 1326507024, %v698
    %v714 = vor.u32 %v712, %v713
    %vm715 = vcmp.lt.s32.totalorder %v696, 1
    %vm716 = vcmp.lt.s32.totalorder %v696, 2
    %vm717 = vcmp.lt.s32.totalorder %v696, 3
    %vm718 = vcmp.lt.s32.totalorder %v696, 4
    %v719 = vsel %vm715, %v699, %v702
    %v720 = vsel %vm718, %v708, 2102212464
    %v721 = vsel %vm717, %v705, %v720
    %v722 = vsel %vm716, %v719, %v721
    %v723 = vsel %vm715, %v702, %v705
    %v724 = vsel %vm718, %v711, 920167782
    %v725 = vsel %vm717, %v708, %v724
    %v726 = vsel %vm716, %v723, %v725
    %v727 = vsel %vm715, %v705, %v708
    %v728 = vsel %vm718, %v714, 1326507024
    %v729 = vsel %vm717, %v711, %v728
    %v730 = vsel %vm716, %v727, %v729
    %v731 = vshll.u32 %v691, 8
    %v732 = vmul.u32.u64.compose %v731, %v730
    %v733 = vextract.low.u32 %v732
    %v734 = vextract.high.u32 %v732
    %v735 = vmul.u32.u64.compose %v731, %v726
    %v736 = vextract.low.u32 %v735
    %v737 = vextract.high.u32 %v735
    %v738 = vmul.u32 %v731, %v722
    %v739 = vadd.s32 %v734, %v736
    %vm740 = vc.u32 %v734, %v736
    %v741 = vadd.s32 %v737, 1
    %v742 = vsel %vm740, %v741, %v737
    %v743 = vadd.s32 %v738, %v742
    %v744 = vadd.s32 %v743, 536870912
    %v745 = vshrl.u32 %v744, 30
    %v746 = vshll.u32 %v745, 30
    %v747 = vsub.s32 %v743, %v746
    %vm748 = vcmp.lt.s32.totalorder %v747, 0
    %v749 = vsub.s32 0, %v747
    %v750 = vsel %vm748, %v749, %v747
    %v751 = vclz %v750
    %v752 = vsub.s32 %v751, 2
    %vm753 = vcmp.gt.s32.totalorder 0, %v752
    %v754 = vsel %vm753, 0, %v752
    %v755 = vsub.s32 32, %v754
    %v756 = vshll.u32 %v747, %v754
    %v757 = vshrl.u32 %v739, %v755
    %v758 = vor.u32 %v756, %v757
    %v759 = vsub.s32 4294967266, %v754
    %v760 = vadd.s32 %v759, 127
    %v761 = vshll.u32 %v760, 23
    %v762 = vor.u32 4788187, %v761
    %v763 = vand.u32 2147483647, %v762
    %v765 = vcvt.s32.f32 %v758
    %v766 = vmul.f32 %v765, %v763
    %v767 = vxor.u32 %v766, 2147483648
    %v768 = vsel %vm685, %v767, %v766
    %v769 = vsub.s32 4, %v745
    %v770 = vsel %vm685, %v769, %v745
    %v771 = vsel %vm684, %v681, %v768
    %v772 = vsel %vm684, 0, %v770
    %v773 = vcosq.f32.pop %v771
    %v774 = vsinq.f32.pop %v771
    %vm775 = vweird.f32 %v681
    %v776 = vadd.s32 %v772, 3
    %v777 = vand.u32 %v776, 3
    %vm778 = vcmp.lt.s32.totalorder %v777, 2
    %vm779 = vcmp.eq.s32.totalorder %v777, 0
    %v780 = vxor.u32 %v774, 2147483648
    %v781 = vsel %vm779, %v773, %v780
    %vm782 = vcmp.eq.s32.totalorder %v777, 2
    %v783 = vxor.u32 %v773, 2147483648
    %v784 = vsel %vm782, %v783, %v774
    %v785 = vsel %vm778, %v781, %v784
    %v786 = vsel %vm775, nan, %v785
    %v787 = vand.u32 2147483647, %v682
    %vm788 = vcmp.le.f32.partialorder %v787, 0.7853982
    %vm789 = vcmp.lt.s32.totalorder %v682, 0
    %v790 = vand.u32 %v682, 2139095040
    %v791 = vshrl.u32 %v790, 23
    %v792 = vsub.s32 %v791, 127
    %v793 = vand.u32 2147483647, %v682
    %v794 = vand.u32 %v793, 8388607
    %v795 = vor.u32 %v794, 8388608
    %v796 = vsub.s32 0, %v795
    %v797 = vadd.s32 %v792, 1
    %vm798 = vcmp.gt.s32.totalorder %v797, 0
    %v799 = vsel %vm798, %v797, 0
    %v800 = vshrl.u32 %v799, 5
    %v801 = vand.u32 %v799, 31
    %v802 = vsub.s32 32, %v801
    %v803 = vshrl.u32 683565275, %v802
    %v804 = vshll.u32 683565275, %v801
    %v805 = vshrl.u32 2475754826, %v802
    %v806 = vor.u32 %v804, %v805
    %v807 = vshll.u32 2475754826, %v801
    %v808 = vshrl.u32 2131351028, %v802
    %v809 = vor.u32 %v807, %v808
    %v810 = vshll.u32 2131351028, %v801
    %v811 = vshrl.u32 2102212464, %v802
    %v812 = vor.u32 %v810, %v811
    %v813 = vshll.u32 2102212464, %v801
    %v814 = vshrl.u32 920167782, %v802
    %v815 = vor.u32 %v813, %v814
    %v816 = vshll.u32 920167782, %v801
    %v817 = vshrl.u32 1326507024, %v802
    %v818 = vor.u32 %v816, %v817
    %vm819 = vcmp.lt.s32.totalorder %v800, 1
    %vm820 = vcmp.lt.s32.totalorder %v800, 2
    %vm821 = vcmp.lt.s32.totalorder %v800, 3
    %vm822 = vcmp.lt.s32.totalorder %v800, 4
    %v823 = vsel %vm819, %v803, %v806
    %v824 = vsel %vm822, %v812, 2102212464
    %v825 = vsel %vm821, %v809, %v824
    %v826 = vsel %vm820, %v823, %v825
    %v827 = vsel %vm819, %v806, %v809
    %v828 = vsel %vm822, %v815, 920167782
    %v829 = vsel %vm821, %v812, %v828
    %v830 = vsel %vm820, %v827, %v829
    %v831 = vsel %vm819, %v809, %v812
    %v832 = vsel %vm822, %v818, 1326507024
    %v833 = vsel %vm821, %v815, %v832
    %v834 = vsel %vm820, %v831, %v833
    %v835 = vshll.u32 %v795, 8
    %v836 = vmul.u32.u64.compose %v835, %v834
    %v837 = vextract.low.u32 %v836
    %v838 = vextract.high.u32 %v836
    %v839 = vmul.u32.u64.compose %v835, %v830
    %v840 = vextract.low.u32 %v839
    %v841 = vextract.high.u32 %v839
    %v842 = vmul.u32 %v835, %v826
    %v843 = vadd.s32 %v838, %v840
    %vm844 = vc.u32 %v838, %v840
    %v845 = vadd.s32 %v841, 1
    %v846 = vsel %vm844, %v845, %v841
    %v847 = vadd.s32 %v842, %v846
    %v848 = vadd.s32 %v847, 536870912
    %v849 = vshrl.u32 %v848, 30
    %v850 = vshll.u32 %v849, 30
    %v851 = vsub.s32 %v847, %v850
    %vm852 = vcmp.lt.s32.totalorder %v851, 0
    %v853 = vsub.s32 0, %v851
    %v854 = vsel %vm852, %v853, %v851
    %v855 = vclz %v854
    %v856 = vsub.s32 %v855, 2
    %vm857 = vcmp.gt.s32.totalorder 0, %v856
    %v858 = vsel %vm857, 0, %v856
    %v859 = vsub.s32 32, %v858
    %v860 = vshll.u32 %v851, %v858
    %v861 = vshrl.u32 %v843, %v859
    %v862 = vor.u32 %v860, %v861
    %v863 = vsub.s32 4294967266, %v858
    %v864 = vadd.s32 %v863, 127
    %v865 = vshll.u32 %v864, 23
    %v866 = vor.u32 4788187, %v865
    %v867 = vand.u32 2147483647, %v866
    %v869 = vcvt.s32.f32 %v862
    %v870 = vmul.f32 %v869, %v867
    %v871 = vxor.u32 %v870, 2147483648
    %v872 = vsel %vm789, %v871, %v870
    %v873 = vsub.s32 4, %v849
    %v874 = vsel %vm789, %v873, %v849
    %v875 = vsel %vm788, %v682, %v872
    %v876 = vsel %vm788, 0, %v874
    %v877 = vcosq.f32.pop %v875
    %v878 = vsinq.f32.pop %v875
    %vm879 = vweird.f32 %v682
    %v880 = vadd.s32 %v876, 3
    %v881 = vand.u32 %v880, 3
    %vm882 = vcmp.lt.s32.totalorder %v881, 2
    %vm883 = vcmp.eq.s32.totalorder %v881, 0
    %v884 = vxor.u32 %v878, 2147483648
    %v885 = vsel %vm883, %v877, %v884
    %vm886 = vcmp.eq.s32.totalorder %v881, 2
    %v887 = vxor.u32 %v877, 2147483648
    %v888 = vsel %vm886, %v887, %v878
    %v889 = vsel %vm882, %v885, %v888
    %v890 = vsel %vm879, nan, %v889
    %893 = vrot.lane.b32.xlu0 %v786, 12
    %v894 = vpop.permute.xlu0 %893
    %895 = vrot.lane.b32.xlu0 %v890, 12
    %v896 = vpop.permute.xlu0 %895
    %vm899 = vcmask 121952
    %900 = vst.msk [vmem:[#allocation2] sm:$0xff] %vm899, %v894
    %901 = vst.msk [vmem:[#allocation2 + $0x8] sm:$0xff] %vm899, %v896
    %v902 = vmul.f32 %v9, 12.566371
    %v903 = vmul.f32 %v10, 12.566371
    %v904 = vadd.f32 %v902, 0.0
    %v905 = vadd.f32 %v903, 0.0
    %v906 = vand.u32 2147483647, %v904
    %vm907 = vcmp.le.f32.partialorder %v906, 0.7853982
    %vm908 = vcmp.lt.s32.totalorder %v904, 0
    %v909 = vand.u32 %v904, 2139095040
    %v910 = vshrl.u32 %v909, 23
    %v911 = vsub.s32 %v910, 127
    %v912 = vand.u32 2147483647, %v904
    %v913 = vand.u32 %v912, 8388607
    %v914 = vor.u32 %v913, 8388608
    %v915 = vsub.s32 0, %v914
    %v916 = vadd.s32 %v911, 1
    %vm917 = vcmp.gt.s32.totalorder %v916, 0
    %v918 = vsel %vm917, %v916, 0
    %v919 = vshrl.u32 %v918, 5
    %v920 = vand.u32 %v918, 31
    %v921 = vsub.s32 32, %v920
    %v922 = vshrl.u32 683565275, %v921
    %v923 = vshll.u32 683565275, %v920
    %v924 = vshrl.u32 2475754826, %v921
    %v925 = vor.u32 %v923, %v924
    %v926 = vshll.u32 2475754826, %v920
    %v927 = vshrl.u32 2131351028, %v921
    %v928 = vor.u32 %v926, %v927
    %v929 = vshll.u32 2131351028, %v920
    %v930 = vshrl.u32 2102212464, %v921
    %v931 = vor.u32 %v929, %v930
    %v932 = vshll.u32 2102212464, %v920
    %v933 = vshrl.u32 920167782, %v921
    %v934 = vor.u32 %v932, %v933
    %v935 = vshll.u32 920167782, %v920
    %v936 = vshrl.u32 1326507024, %v921
    %v937 = vor.u32 %v935, %v936
    %vm938 = vcmp.lt.s32.totalorder %v919, 1
    %vm939 = vcmp.lt.s32.totalorder %v919, 2
    %vm940 = vcmp.lt.s32.totalorder %v919, 3
    %vm941 = vcmp.lt.s32.totalorder %v919, 4
    %v942 = vsel %vm938, %v922, %v925
    %v943 = vsel %vm941, %v931, 2102212464
    %v944 = vsel %vm940, %v928, %v943
    %v945 = vsel %vm939, %v942, %v944
    %v946 = vsel %vm938, %v925, %v928
    %v947 = vsel %vm941, %v934, 920167782
    %v948 = vsel %vm940, %v931, %v947
    %v949 = vsel %vm939, %v946, %v948
    %v950 = vsel %vm938, %v928, %v931
    %v951 = vsel %vm941, %v937, 1326507024
    %v952 = vsel %vm940, %v934, %v951
    %v953 = vsel %vm939, %v950, %v952
    %v954 = vshll.u32 %v914, 8
    %v955 = vmul.u32.u64.compose %v954, %v953
    %v956 = vextract.low.u32 %v955
    %v957 = vextract.high.u32 %v955
    %v958 = vmul.u32.u64.compose %v954, %v949
    %v959 = vextract.low.u32 %v958
    %v960 = vextract.high.u32 %v958
    %v961 = vmul.u32 %v954, %v945
    %v962 = vadd.s32 %v957, %v959
    %vm963 = vc.u32 %v957, %v959
    %v964 = vadd.s32 %v960, 1
    %v965 = vsel %vm963, %v964, %v960
    %v966 = vadd.s32 %v961, %v965
    %v967 = vadd.s32 %v966, 536870912
    %v968 = vshrl.u32 %v967, 30
    %v969 = vshll.u32 %v968, 30
    %v970 = vsub.s32 %v966, %v969
    %vm971 = vcmp.lt.s32.totalorder %v970, 0
    %v972 = vsub.s32 0, %v970
    %v973 = vsel %vm971, %v972, %v970
    %v974 = vclz %v973
    %v975 = vsub.s32 %v974, 2
    %vm976 = vcmp.gt.s32.totalorder 0, %v975
    %v977 = vsel %vm976, 0, %v975
    %v978 = vsub.s32 32, %v977
    %v979 = vshll.u32 %v970, %v977
    %v980 = vshrl.u32 %v962, %v978
    %v981 = vor.u32 %v979, %v980
    %v982 = vsub.s32 4294967266, %v977
    %v983 = vadd.s32 %v982, 127
    %v984 = vshll.u32 %v983, 23
    %v985 = vor.u32 4788187, %v984
    %v986 = vand.u32 2147483647, %v985
    %v988 = vcvt.s32.f32 %v981
    %v989 = vmul.f32 %v988, %v986
    %v990 = vxor.u32 %v989, 2147483648
    %v991 = vsel %vm908, %v990, %v989
    %v992 = vsub.s32 4, %v968
    %v993 = vsel %vm908, %v992, %v968
    %v994 = vsel %vm907, %v904, %v991
    %v995 = vsel %vm907, 0, %v993
    %v996 = vcosq.f32.pop %v994
    %v997 = vsinq.f32.pop %v994
    %vm998 = vweird.f32 %v904
    %v999 = vadd.s32 %v995, 3
    %v1000 = vand.u32 %v999, 3
    %vm1001 = vcmp.lt.s32.totalorder %v1000, 2
    %vm1002 = vcmp.eq.s32.totalorder %v1000, 0
    %v1003 = vxor.u32 %v997, 2147483648
    %v1004 = vsel %vm1002, %v996, %v1003
    %vm1005 = vcmp.eq.s32.totalorder %v1000, 2
    %v1006 = vxor.u32 %v996, 2147483648
    %v1007 = vsel %vm1005, %v1006, %v997
    %v1008 = vsel %vm1001, %v1004, %v1007
    %v1009 = vsel %vm998, nan, %v1008
    %v1010 = vand.u32 2147483647, %v905
    %vm1011 = vcmp.le.f32.partialorder %v1010, 0.7853982
    %vm1012 = vcmp.lt.s32.totalorder %v905, 0
    %v1013 = vand.u32 %v905, 2139095040
    %v1014 = vshrl.u32 %v1013, 23
    %v1015 = vsub.s32 %v1014, 127
    %v1016 = vand.u32 2147483647, %v905
    %v1017 = vand.u32 %v1016, 8388607
    %v1018 = vor.u32 %v1017, 8388608
    %v1019 = vsub.s32 0, %v1018
    %v1020 = vadd.s32 %v1015, 1
    %vm1021 = vcmp.gt.s32.totalorder %v1020, 0
    %v1022 = vsel %vm1021, %v1020, 0
    %v1023 = vshrl.u32 %v1022, 5
    %v1024 = vand.u32 %v1022, 31
    %v1025 = vsub.s32 32, %v1024
    %v1026 = vshrl.u32 683565275, %v1025
    %v1027 = vshll.u32 683565275, %v1024
    %v1028 = vshrl.u32 2475754826, %v1025
    %v1029 = vor.u32 %v1027, %v1028
    %v1030 = vshll.u32 2475754826, %v1024
    %v1031 = vshrl.u32 2131351028, %v1025
    %v1032 = vor.u32 %v1030, %v1031
    %v1033 = vshll.u32 2131351028, %v1024
    %v1034 = vshrl.u32 2102212464, %v1025
    %v1035 = vor.u32 %v1033, %v1034
    %v1036 = vshll.u32 2102212464, %v1024
    %v1037 = vshrl.u32 920167782, %v1025
    %v1038 = vor.u32 %v1036, %v1037
    %v1039 = vshll.u32 920167782, %v1024
    %v1040 = vshrl.u32 1326507024, %v1025
    %v1041 = vor.u32 %v1039, %v1040
    %vm1042 = vcmp.lt.s32.totalorder %v1023, 1
    %vm1043 = vcmp.lt.s32.totalorder %v1023, 2
    %vm1044 = vcmp.lt.s32.totalorder %v1023, 3
    %vm1045 = vcmp.lt.s32.totalorder %v1023, 4
    %v1046 = vsel %vm1042, %v1026, %v1029
    %v1047 = vsel %vm1045, %v1035, 2102212464
    %v1048 = vsel %vm1044, %v1032, %v1047
    %v1049 = vsel %vm1043, %v1046, %v1048
    %v1050 = vsel %vm1042, %v1029, %v1032
    %v1051 = vsel %vm1045, %v1038, 920167782
    %v1052 = vsel %vm1044, %v1035, %v1051
    %v1053 = vsel %vm1043, %v1050, %v1052
    %v1054 = vsel %vm1042, %v1032, %v1035
    %v1055 = vsel %vm1045, %v1041, 1326507024
    %v1056 = vsel %vm1044, %v1038, %v1055
    %v1057 = vsel %vm1043, %v1054, %v1056
    %v1058 = vshll.u32 %v1018, 8
    %v1059 = vmul.u32.u64.compose %v1058, %v1057
    %v1060 = vextract.low.u32 %v1059
    %v1061 = vextract.high.u32 %v1059
    %v1062 = vmul.u32.u64.compose %v1058, %v1053
    %v1063 = vextract.low.u32 %v1062
    %v1064 = vextract.high.u32 %v1062
    %v1065 = vmul.u32 %v1058, %v1049
    %v1066 = vadd.s32 %v1061, %v1063
    %vm1067 = vc.u32 %v1061, %v1063
    %v1068 = vadd.s32 %v1064, 1
    %v1069 = vsel %vm1067, %v1068, %v1064
    %v1070 = vadd.s32 %v1065, %v1069
    %v1071 = vadd.s32 %v1070, 536870912
    %v1072 = vshrl.u32 %v1071, 30
    %v1073 = vshll.u32 %v1072, 30
    %v1074 = vsub.s32 %v1070, %v1073
    %vm1075 = vcmp.lt.s32.totalorder %v1074, 0
    %v1076 = vsub.s32 0, %v1074
    %v1077 = vsel %vm1075, %v1076, %v1074
    %v1078 = vclz %v1077
    %v1079 = vsub.s32 %v1078, 2
    %vm1080 = vcmp.gt.s32.totalorder 0, %v1079
    %v1081 = vsel %vm1080, 0, %v1079
    %v1082 = vsub.s32 32, %v1081
    %v1083 = vshll.u32 %v1074, %v1081
    %v1084 = vshrl.u32 %v1066, %v1082
    %v1085 = vor.u32 %v1083, %v1084
    %v1086 = vsub.s32 4294967266, %v1081
    %v1087 = vadd.s32 %v1086, 127
    %v1088 = vshll.u32 %v1087, 23
    %v1089 = vor.u32 4788187, %v1088
    %v1090 = vand.u32 2147483647, %v1089
    %v1092 = vcvt.s32.f32 %v1085
    %v1093 = vmul.f32 %v1092, %v1090
    %v1094 = vxor.u32 %v1093, 2147483648
    %v1095 = vsel %vm1012, %v1094, %v1093
    %v1096 = vsub.s32 4, %v1072
    %v1097 = vsel %vm1012, %v1096, %v1072
    %v1098 = vsel %vm1011, %v905, %v1095
    %v1099 = vsel %vm1011, 0, %v1097
    %v1100 = vcosq.f32.pop %v1098
    %v1101 = vsinq.f32.pop %v1098
    %vm1102 = vweird.f32 %v905
    %v1103 = vadd.s32 %v1099, 3
    %v1104 = vand.u32 %v1103, 3
    %vm1105 = vcmp.lt.s32.totalorder %v1104, 2
    %vm1106 = vcmp.eq.s32.totalorder %v1104, 0
    %v1107 = vxor.u32 %v1101, 2147483648
    %v1108 = vsel %vm1106, %v1100, %v1107
    %vm1109 = vcmp.eq.s32.totalorder %v1104, 2
    %v1110 = vxor.u32 %v1100, 2147483648
    %v1111 = vsel %vm1109, %v1110, %v1101
    %v1112 = vsel %vm1105, %v1108, %v1111
    %v1113 = vsel %vm1102, nan, %v1112
    %1116 = vrot.lane.b32.xlu0 %v1009, 15
    %v1117 = vpop.permute.xlu0 %1116
    %1118 = vrot.lane.b32.xlu0 %v1113, 15
    %v1119 = vpop.permute.xlu0 %1118
    %vm1122 = vcmask 146552
    %1123 = vst.msk [vmem:[#allocation2] sm:$0xff] %vm1122, %v1117
    %1124 = vst.msk [vmem:[#allocation2 + $0x8] sm:$0xff] %vm1122, %v1119
    %v1125 = vadd.f32 %v902, 1.5707964
    %v1126 = vadd.f32 %v903, 1.5707964
    %v1127 = vand.u32 2147483647, %v1125
    %vm1128 = vcmp.le.f32.partialorder %v1127, 0.7853982
    %vm1129 = vcmp.lt.s32.totalorder %v1125, 0
    %v1130 = vand.u32 %v1125, 2139095040
    %v1131 = vshrl.u32 %v1130, 23
    %v1132 = vsub.s32 %v1131, 127
    %v1133 = vand.u32 2147483647, %v1125
    %v1134 = vand.u32 %v1133, 8388607
    %v1135 = vor.u32 %v1134, 8388608
    %v1136 = vsub.s32 0, %v1135
    %v1137 = vadd.s32 %v1132, 1
    %vm1138 = vcmp.gt.s32.totalorder %v1137, 0
    %v1139 = vsel %vm1138, %v1137, 0
    %v1140 = vshrl.u32 %v1139, 5
    %v1141 = vand.u32 %v1139, 31
    %v1142 = vsub.s32 32, %v1141
    %v1143 = vshrl.u32 683565275, %v1142
    %v1144 = vshll.u32 683565275, %v1141
    %v1145 = vshrl.u32 2475754826, %v1142
    %v1146 = vor.u32 %v1144, %v1145
    %v1147 = vshll.u32 2475754826, %v1141
    %v1148 = vshrl.u32 2131351028, %v1142
    %v1149 = vor.u32 %v1147, %v1148
    %v1150 = vshll.u32 2131351028, %v1141
    %v1151 = vshrl.u32 2102212464, %v1142
    %v1152 = vor.u32 %v1150, %v1151
    %v1153 = vshll.u32 2102212464, %v1141
    %v1154 = vshrl.u32 920167782, %v1142
    %v1155 = vor.u32 %v1153, %v1154
    %v1156 = vshll.u32 920167782, %v1141
    %v1157 = vshrl.u32 1326507024, %v1142
    %v1158 = vor.u32 %v1156, %v1157
    %vm1159 = vcmp.lt.s32.totalorder %v1140, 1
    %vm1160 = vcmp.lt.s32.totalorder %v1140, 2
    %vm1161 = vcmp.lt.s32.totalorder %v1140, 3
    %vm1162 = vcmp.lt.s32.totalorder %v1140, 4
    %v1163 = vsel %vm1159, %v1143, %v1146
    %v1164 = vsel %vm1162, %v1152, 2102212464
    %v1165 = vsel %vm1161, %v1149, %v1164
    %v1166 = vsel %vm1160, %v1163, %v1165
    %v1167 = vsel %vm1159, %v1146, %v1149
    %v1168 = vsel %vm1162, %v1155, 920167782
    %v1169 = vsel %vm1161, %v1152, %v1168
    %v1170 = vsel %vm1160, %v1167, %v1169
    %v1171 = vsel %vm1159, %v1149, %v1152
    %v1172 = vsel %vm1162, %v1158, 1326507024
    %v1173 = vsel %vm1161, %v1155, %v1172
    %v1174 = vsel %vm1160, %v1171, %v1173
    %v1175 = vshll.u32 %v1135, 8
    %v1176 = vmul.u32.u64.compose %v1175, %v1174
    %v1177 = vextract.low.u32 %v1176
    %v1178 = vextract.high.u32 %v1176
    %v1179 = vmul.u32.u64.compose %v1175, %v1170
    %v1180 = vextract.low.u32 %v1179
    %v1181 = vextract.high.u32 %v1179
    %v1182 = vmul.u32 %v1175, %v1166
    %v1183 = vadd.s32 %v1178, %v1180
    %vm1184 = vc.u32 %v1178, %v1180
    %v1185 = vadd.s32 %v1181, 1
    %v1186 = vsel %vm1184, %v1185, %v1181
    %v1187 = vadd.s32 %v1182, %v1186
    %v1188 = vadd.s32 %v1187, 536870912
    %v1189 = vshrl.u32 %v1188, 30
    %v1190 = vshll.u32 %v1189, 30
    %v1191 = vsub.s32 %v1187, %v1190
    %vm1192 = vcmp.lt.s32.totalorder %v1191, 0
    %v1193 = vsub.s32 0, %v1191
    %v1194 = vsel %vm1192, %v1193, %v1191
    %v1195 = vclz %v1194
    %v1196 = vsub.s32 %v1195, 2
    %vm1197 = vcmp.gt.s32.totalorder 0, %v1196
    %v1198 = vsel %vm1197, 0, %v1196
    %v1199 = vsub.s32 32, %v1198
    %v1200 = vshll.u32 %v1191, %v1198
    %v1201 = vshrl.u32 %v1183, %v1199
    %v1202 = vor.u32 %v1200, %v1201
    %v1203 = vsub.s32 4294967266, %v1198
    %v1204 = vadd.s32 %v1203, 127
    %v1205 = vshll.u32 %v1204, 23
    %v1206 = vor.u32 4788187, %v1205
    %v1207 = vand.u32 2147483647, %v1206
    %v1209 = vcvt.s32.f32 %v1202
    %v1210 = vmul.f32 %v1209, %v1207
    %v1211 = vxor.u32 %v1210, 2147483648
    %v1212 = vsel %vm1129, %v1211, %v1210
    %v1213 = vsub.s32 4, %v1189
    %v1214 = vsel %vm1129, %v1213, %v1189
    %v1215 = vsel %vm1128, %v1125, %v1212
    %v1216 = vsel %vm1128, 0, %v1214
    %v1217 = vcosq.f32.pop %v1215
    %v1218 = vsinq.f32.pop %v1215
    %vm1219 = vweird.f32 %v1125
    %v1220 = vadd.s32 %v1216, 3
    %v1221 = vand.u32 %v1220, 3
    %vm1222 = vcmp.lt.s32.totalorder %v1221, 2
    %vm1223 = vcmp.eq.s32.totalorder %v1221, 0
    %v1224 = vxor.u32 %v1218, 2147483648
    %v1225 = vsel %vm1223, %v1217, %v1224
    %vm1226 = vcmp.eq.s32.totalorder %v1221, 2
    %v1227 = vxor.u32 %v1217, 2147483648
    %v1228 = vsel %vm1226, %v1227, %v1218
    %v1229 = vsel %vm1222, %v1225, %v1228
    %v1230 = vsel %vm1219, nan, %v1229
    %v1231 = vand.u32 2147483647, %v1126
    %vm1232 = vcmp.le.f32.partialorder %v1231, 0.7853982
    %vm1233 = vcmp.lt.s32.totalorder %v1126, 0
    %v1234 = vand.u32 %v1126, 2139095040
    %v1235 = vshrl.u32 %v1234, 23
    %v1236 = vsub.s32 %v1235, 127
    %v1237 = vand.u32 2147483647, %v1126
    %v1238 = vand.u32 %v1237, 8388607
    %v1239 = vor.u32 %v1238, 8388608
    %v1240 = vsub.s32 0, %v1239
    %v1241 = vadd.s32 %v1236, 1
    %vm1242 = vcmp.gt.s32.totalorder %v1241, 0
    %v1243 = vsel %vm1242, %v1241, 0
    %v1244 = vshrl.u32 %v1243, 5
    %v1245 = vand.u32 %v1243, 31
    %v1246 = vsub.s32 32, %v1245
    %v1247 = vshrl.u32 683565275, %v1246
    %v1248 = vshll.u32 683565275, %v1245
    %v1249 = vshrl.u32 2475754826, %v1246
    %v1250 = vor.u32 %v1248, %v1249
    %v1251 = vshll.u32 2475754826, %v1245
    %v1252 = vshrl.u32 2131351028, %v1246
    %v1253 = vor.u32 %v1251, %v1252
    %v1254 = vshll.u32 2131351028, %v1245
    %v1255 = vshrl.u32 2102212464, %v1246
    %v1256 = vor.u32 %v1254, %v1255
    %v1257 = vshll.u32 2102212464, %v1245
    %v1258 = vshrl.u32 920167782, %v1246
    %v1259 = vor.u32 %v1257, %v1258
    %v1260 = vshll.u32 920167782, %v1245
    %v1261 = vshrl.u32 1326507024, %v1246
    %v1262 = vor.u32 %v1260, %v1261
    %vm1263 = vcmp.lt.s32.totalorder %v1244, 1
    %vm1264 = vcmp.lt.s32.totalorder %v1244, 2
    %vm1265 = vcmp.lt.s32.totalorder %v1244, 3
    %vm1266 = vcmp.lt.s32.totalorder %v1244, 4
    %v1267 = vsel %vm1263, %v1247, %v1250
    %v1268 = vsel %vm1266, %v1256, 2102212464
    %v1269 = vsel %vm1265, %v1253, %v1268
    %v1270 = vsel %vm1264, %v1267, %v1269
    %v1271 = vsel %vm1263, %v1250, %v1253
    %v1272 = vsel %vm1266, %v1259, 920167782
    %v1273 = vsel %vm1265, %v1256, %v1272
    %v1274 = vsel %vm1264, %v1271, %v1273
    %v1275 = vsel %vm1263, %v1253, %v1256
    %v1276 = vsel %vm1266, %v1262, 1326507024
    %v1277 = vsel %vm1265, %v1259, %v1276
    %v1278 = vsel %vm1264, %v1275, %v1277
    %v1279 = vshll.u32 %v1239, 8
    %v1280 = vmul.u32.u64.compose %v1279, %v1278
    %v1281 = vextract.low.u32 %v1280
    %v1282 = vextract.high.u32 %v1280
    %v1283 = vmul.u32.u64.compose %v1279, %v1274
    %v1284 = vextract.low.u32 %v1283
    %v1285 = vextract.high.u32 %v1283
    %v1286 = vmul.u32 %v1279, %v1270
    %v1287 = vadd.s32 %v1282, %v1284
    %vm1288 = vc.u32 %v1282, %v1284
    %v1289 = vadd.s32 %v1285, 1
    %v1290 = vsel %vm1288, %v1289, %v1285
    %v1291 = vadd.s32 %v1286, %v1290
    %v1292 = vadd.s32 %v1291, 536870912
    %v1293 = vshrl.u32 %v1292, 30
    %v1294 = vshll.u32 %v1293, 30
    %v1295 = vsub.s32 %v1291, %v1294
    %vm1296 = vcmp.lt.s32.totalorder %v1295, 0
    %v1297 = vsub.s32 0, %v1295
    %v1298 = vsel %vm1296, %v1297, %v1295
    %v1299 = vclz %v1298
    %v1300 = vsub.s32 %v1299, 2
    %vm1301 = vcmp.gt.s32.totalorder 0, %v1300
    %v1302 = vsel %vm1301, 0, %v1300
    %v1303 = vsub.s32 32, %v1302
    %v1304 = vshll.u32 %v1295, %v1302
    %v1305 = vshrl.u32 %v1287, %v1303
    %v1306 = vor.u32 %v1304, %v1305
    %v1307 = vsub.s32 4294967266, %v1302
    %v1308 = vadd.s32 %v1307, 127
    %v1309 = vshll.u32 %v1308, 23
    %v1310 = vor.u32 4788187, %v1309
    %v1311 = vand.u32 2147483647, %v1310
    %v1313 = vcvt.s32.f32 %v1306
    %v1314 = vmul.f32 %v1313, %v1311
    %v1315 = vxor.u32 %v1314, 2147483648
    %v1316 = vsel %vm1233, %v1315, %v1314
    %v1317 = vsub.s32 4, %v1293
    %v1318 = vsel %vm1233, %v1317, %v1293
    %v1319 = vsel %vm1232, %v1126, %v1316
    %v1320 = vsel %vm1232, 0, %v1318
    %v1321 = vcosq.f32.pop %v1319
    %v1322 = vsinq.f32.pop %v1319
    %vm1323 = vweird.f32 %v1126
    %v1324 = vadd.s32 %v1320, 3
    %v1325 = vand.u32 %v1324, 3
    %vm1326 = vcmp.lt.s32.totalorder %v1325, 2
    %vm1327 = vcmp.eq.s32.totalorder %v1325, 0
    %v1328 = vxor.u32 %v1322, 2147483648
    %v1329 = vsel %vm1327, %v1321, %v1328
    %vm1330 = vcmp.eq.s32.totalorder %v1325, 2
    %v1331 = vxor.u32 %v1321, 2147483648
    %v1332 = vsel %vm1330, %v1331, %v1322
    %v1333 = vsel %vm1326, %v1329, %v1332
    %v1334 = vsel %vm1323, nan, %v1333
    %1337 = vrot.lane.b32.xlu0 %v1230, 18
    %v1338 = vpop.permute.xlu0 %1337
    %1339 = vrot.lane.b32.xlu0 %v1334, 18
    %v1340 = vpop.permute.xlu0 %1339
    %vm1343 = vcmask 171152
    %1344 = vst.msk [vmem:[#allocation2] sm:$0xff] %vm1343, %v1338
    %1345 = vst.msk [vmem:[#allocation2 + $0x8] sm:$0xff] %vm1343, %v1340
    %v1346 = vmul.f32 %v9, 25.132742
    %v1347 = vmul.f32 %v10, 25.132742
    %v1348 = vadd.f32 %v1346, 0.0
    %v1349 = vadd.f32 %v1347, 0.0
    %v1350 = vand.u32 2147483647, %v1348
    %vm1351 = vcmp.le.f32.partialorder %v1350, 0.7853982
    %vm1352 = vcmp.lt.s32.totalorder %v1348, 0
    %v1353 = vand.u32 %v1348, 2139095040
    %v1354 = vshrl.u32 %v1353, 23
    %v1355 = vsub.s32 %v1354, 127
    %v1356 = vand.u32 2147483647, %v1348
    %v1357 = vand.u32 %v1356, 8388607
    %v1358 = vor.u32 %v1357, 8388608
    %v1359 = vsub.s32 0, %v1358
    %v1360 = vadd.s32 %v1355, 1
    %vm1361 = vcmp.gt.s32.totalorder %v1360, 0
    %v1362 = vsel %vm1361, %v1360, 0
    %v1363 = vshrl.u32 %v1362, 5
    %v1364 = vand.u32 %v1362, 31
    %v1365 = vsub.s32 32, %v1364
    %v1366 = vshrl.u32 683565275, %v1365
    %v1367 = vshll.u32 683565275, %v1364
    %v1368 = vshrl.u32 2475754826, %v1365
    %v1369 = vor.u32 %v1367, %v1368
    %v1370 = vshll.u32 2475754826, %v1364
    %v1371 = vshrl.u32 2131351028, %v1365
    %v1372 = vor.u32 %v1370, %v1371
    %v1373 = vshll.u32 2131351028, %v1364
    %v1374 = vshrl.u32 2102212464, %v1365
    %v1375 = vor.u32 %v1373, %v1374
    %v1376 = vshll.u32 2102212464, %v1364
    %v1377 = vshrl.u32 920167782, %v1365
    %v1378 = vor.u32 %v1376, %v1377
    %v1379 = vshll.u32 920167782, %v1364
    %v1380 = vshrl.u32 1326507024, %v1365
    %v1381 = vor.u32 %v1379, %v1380
    %vm1382 = vcmp.lt.s32.totalorder %v1363, 1
    %vm1383 = vcmp.lt.s32.totalorder %v1363, 2
    %vm1384 = vcmp.lt.s32.totalorder %v1363, 3
    %vm1385 = vcmp.lt.s32.totalorder %v1363, 4
    %v1386 = vsel %vm1382, %v1366, %v1369
    %v1387 = vsel %vm1385, %v1375, 2102212464
    %v1388 = vsel %vm1384, %v1372, %v1387
    %v1389 = vsel %vm1383, %v1386, %v1388
    %v1390 = vsel %vm1382, %v1369, %v1372
    %v1391 = vsel %vm1385, %v1378, 920167782
    %v1392 = vsel %vm1384, %v1375, %v1391
    %v1393 = vsel %vm1383, %v1390, %v1392
    %v1394 = vsel %vm1382, %v1372, %v1375
    %v1395 = vsel %vm1385, %v1381, 1326507024
    %v1396 = vsel %vm1384, %v1378, %v1395
    %v1397 = vsel %vm1383, %v1394, %v1396
    %v1398 = vshll.u32 %v1358, 8
    %v1399 = vmul.u32.u64.compose %v1398, %v1397
    %v1400 = vextract.low.u32 %v1399
    %v1401 = vextract.high.u32 %v1399
    %v1402 = vmul.u32.u64.compose %v1398, %v1393
    %v1403 = vextract.low.u32 %v1402
    %v1404 = vextract.high.u32 %v1402
    %v1405 = vmul.u32 %v1398, %v1389
    %v1406 = vadd.s32 %v1401, %v1403
    %vm1407 = vc.u32 %v1401, %v1403
    %v1408 = vadd.s32 %v1404, 1
    %v1409 = vsel %vm1407, %v1408, %v1404
    %v1410 = vadd.s32 %v1405, %v1409
    %v1411 = vadd.s32 %v1410, 536870912
    %v1412 = vshrl.u32 %v1411, 30
    %v1413 = vshll.u32 %v1412, 30
    %v1414 = vsub.s32 %v1410, %v1413
    %vm1415 = vcmp.lt.s32.totalorder %v1414, 0
    %v1416 = vsub.s32 0, %v1414
    %v1417 = vsel %vm1415, %v1416, %v1414
    %v1418 = vclz %v1417
    %v1419 = vsub.s32 %v1418, 2
    %vm1420 = vcmp.gt.s32.totalorder 0, %v1419
    %v1421 = vsel %vm1420, 0, %v1419
    %v1422 = vsub.s32 32, %v1421
    %v1423 = vshll.u32 %v1414, %v1421
    %v1424 = vshrl.u32 %v1406, %v1422
    %v1425 = vor.u32 %v1423, %v1424
    %v1426 = vsub.s32 4294967266, %v1421
    %v1427 = vadd.s32 %v1426, 127
    %v1428 = vshll.u32 %v1427, 23
    %v1429 = vor.u32 4788187, %v1428
    %v1430 = vand.u32 2147483647, %v1429
    %v1432 = vcvt.s32.f32 %v1425
    %v1433 = vmul.f32 %v1432, %v1430
    %v1434 = vxor.u32 %v1433, 2147483648
    %v1435 = vsel %vm1352, %v1434, %v1433
    %v1436 = vsub.s32 4, %v1412
    %v1437 = vsel %vm1352, %v1436, %v1412
    %v1438 = vsel %vm1351, %v1348, %v1435
    %v1439 = vsel %vm1351, 0, %v1437
    %v1440 = vcosq.f32.pop %v1438
    %v1441 = vsinq.f32.pop %v1438
    %vm1442 = vweird.f32 %v1348
    %v1443 = vadd.s32 %v1439, 3
    %v1444 = vand.u32 %v1443, 3
    %vm1445 = vcmp.lt.s32.totalorder %v1444, 2
    %vm1446 = vcmp.eq.s32.totalorder %v1444, 0
    %v1447 = vxor.u32 %v1441, 2147483648
    %v1448 = vsel %vm1446, %v1440, %v1447
    %vm1449 = vcmp.eq.s32.totalorder %v1444, 2
    %v1450 = vxor.u32 %v1440, 2147483648
    %v1451 = vsel %vm1449, %v1450, %v1441
    %v1452 = vsel %vm1445, %v1448, %v1451
    %v1453 = vsel %vm1442, nan, %v1452
    %v1454 = vand.u32 2147483647, %v1349
    %vm1455 = vcmp.le.f32.partialorder %v1454, 0.7853982
    %vm1456 = vcmp.lt.s32.totalorder %v1349, 0
    %v1457 = vand.u32 %v1349, 2139095040
    %v1458 = vshrl.u32 %v1457, 23
    %v1459 = vsub.s32 %v1458, 127
    %v1460 = vand.u32 2147483647, %v1349
    %v1461 = vand.u32 %v1460, 8388607
    %v1462 = vor.u32 %v1461, 8388608
    %v1463 = vsub.s32 0, %v1462
    %v1464 = vadd.s32 %v1459, 1
    %vm1465 = vcmp.gt.s32.totalorder %v1464, 0
    %v1466 = vsel %vm1465, %v1464, 0
    %v1467 = vshrl.u32 %v1466, 5
    %v1468 = vand.u32 %v1466, 31
    %v1469 = vsub.s32 32, %v1468
    %v1470 = vshrl.u32 683565275, %v1469
    %v1471 = vshll.u32 683565275, %v1468
    %v1472 = vshrl.u32 2475754826, %v1469
    %v1473 = vor.u32 %v1471, %v1472
    %v1474 = vshll.u32 2475754826, %v1468
    %v1475 = vshrl.u32 2131351028, %v1469
    %v1476 = vor.u32 %v1474, %v1475
    %v1477 = vshll.u32 2131351028, %v1468
    %v1478 = vshrl.u32 2102212464, %v1469
    %v1479 = vor.u32 %v1477, %v1478
    %v1480 = vshll.u32 2102212464, %v1468
    %v1481 = vshrl.u32 920167782, %v1469
    %v1482 = vor.u32 %v1480, %v1481
    %v1483 = vshll.u32 920167782, %v1468
    %v1484 = vshrl.u32 1326507024, %v1469
    %v1485 = vor.u32 %v1483, %v1484
    %vm1486 = vcmp.lt.s32.totalorder %v1467, 1
    %vm1487 = vcmp.lt.s32.totalorder %v1467, 2
    %vm1488 = vcmp.lt.s32.totalorder %v1467, 3
    %vm1489 = vcmp.lt.s32.totalorder %v1467, 4
    %v1490 = vsel %vm1486, %v1470, %v1473
    %v1491 = vsel %vm1489, %v1479, 2102212464
    %v1492 = vsel %vm1488, %v1476, %v1491
    %v1493 = vsel %vm1487, %v1490, %v1492
    %v1494 = vsel %vm1486, %v1473, %v1476
    %v1495 = vsel %vm1489, %v1482, 920167782
    %v1496 = vsel %vm1488, %v1479, %v1495
    %v1497 = vsel %vm1487, %v1494, %v1496
    %v1498 = vsel %vm1486, %v1476, %v1479
    %v1499 = vsel %vm1489, %v1485, 1326507024
    %v1500 = vsel %vm1488, %v1482, %v1499
    %v1501 = vsel %vm1487, %v1498, %v1500
    %v1502 = vshll.u32 %v1462, 8
    %v1503 = vmul.u32.u64.compose %v1502, %v1501
    %v1504 = vextract.low.u32 %v1503
    %v1505 = vextract.high.u32 %v1503
    %v1506 = vmul.u32.u64.compose %v1502, %v1497
    %v1507 = vextract.low.u32 %v1506
    %v1508 = vextract.high.u32 %v1506
    %v1509 = vmul.u32 %v1502, %v1493
    %v1510 = vadd.s32 %v1505, %v1507
    %vm1511 = vc.u32 %v1505, %v1507
    %v1512 = vadd.s32 %v1508, 1
    %v1513 = vsel %vm1511, %v1512, %v1508
    %v1514 = vadd.s32 %v1509, %v1513
    %v1515 = vadd.s32 %v1514, 536870912
    %v1516 = vshrl.u32 %v1515, 30
    %v1517 = vshll.u32 %v1516, 30
    %v1518 = vsub.s32 %v1514, %v1517
    %vm1519 = vcmp.lt.s32.totalorder %v1518, 0
    %v1520 = vsub.s32 0, %v1518
    %v1521 = vsel %vm1519, %v1520, %v1518
    %v1522 = vclz %v1521
    %v1523 = vsub.s32 %v1522, 2
    %vm1524 = vcmp.gt.s32.totalorder 0, %v1523
    %v1525 = vsel %vm1524, 0, %v1523
    %v1526 = vsub.s32 32, %v1525
    %v1527 = vshll.u32 %v1518, %v1525
    %v1528 = vshrl.u32 %v1510, %v1526
    %v1529 = vor.u32 %v1527, %v1528
    %v1530 = vsub.s32 4294967266, %v1525
    %v1531 = vadd.s32 %v1530, 127
    %v1532 = vshll.u32 %v1531, 23
    %v1533 = vor.u32 4788187, %v1532
    %v1534 = vand.u32 2147483647, %v1533
    %v1536 = vcvt.s32.f32 %v1529
    %v1537 = vmul.f32 %v1536, %v1534
    %v1538 = vxor.u32 %v1537, 2147483648
    %v1539 = vsel %vm1456, %v1538, %v1537
    %v1540 = vsub.s32 4, %v1516
    %v1541 = vsel %vm1456, %v1540, %v1516
    %v1542 = vsel %vm1455, %v1349, %v1539
    %v1543 = vsel %vm1455, 0, %v1541
    %v1544 = vcosq.f32.pop %v1542
    %v1545 = vsinq.f32.pop %v1542
    %vm1546 = vweird.f32 %v1349
    %v1547 = vadd.s32 %v1543, 3
    %v1548 = vand.u32 %v1547, 3
    %vm1549 = vcmp.lt.s32.totalorder %v1548, 2
    %vm1550 = vcmp.eq.s32.totalorder %v1548, 0
    %v1551 = vxor.u32 %v1545, 2147483648
    %v1552 = vsel %vm1550, %v1544, %v1551
    %vm1553 = vcmp.eq.s32.totalorder %v1548, 2
    %v1554 = vxor.u32 %v1544, 2147483648
    %v1555 = vsel %vm1553, %v1554, %v1545
    %v1556 = vsel %vm1549, %v1552, %v1555
    %v1557 = vsel %vm1546, nan, %v1556
    %1560 = vrot.lane.b32.xlu0 %v1453, 21
    %v1561 = vpop.permute.xlu0 %1560
    %1562 = vrot.lane.b32.xlu0 %v1557, 21
    %v1563 = vpop.permute.xlu0 %1562
    %vm1566 = vcmask 195752
    %1567 = vst.msk [vmem:[#allocation2] sm:$0xff] %vm1566, %v1561
    %1568 = vst.msk [vmem:[#allocation2 + $0x8] sm:$0xff] %vm1566, %v1563
    %v1569 = vadd.f32 %v1346, 1.5707964
    %v1570 = vadd.f32 %v1347, 1.5707964
    %v1571 = vand.u32 2147483647, %v1569
    %vm1572 = vcmp.le.f32.partialorder %v1571, 0.7853982
    %vm1573 = vcmp.lt.s32.totalorder %v1569, 0
    %v1574 = vand.u32 %v1569, 2139095040
    %v1575 = vshrl.u32 %v1574, 23
    %v1576 = vsub.s32 %v1575, 127
    %v1577 = vand.u32 2147483647, %v1569
    %v1578 = vand.u32 %v1577, 8388607
    %v1579 = vor.u32 %v1578, 8388608
    %v1580 = vsub.s32 0, %v1579
    %v1581 = vadd.s32 %v1576, 1
    %vm1582 = vcmp.gt.s32.totalorder %v1581, 0
    %v1583 = vsel %vm1582, %v1581, 0
    %v1584 = vshrl.u32 %v1583, 5
    %v1585 = vand.u32 %v1583, 31
    %v1586 = vsub.s32 32, %v1585
    %v1587 = vshrl.u32 683565275, %v1586
    %v1588 = vshll.u32 683565275, %v1585
    %v1589 = vshrl.u32 2475754826, %v1586
    %v1590 = vor.u32 %v1588, %v1589
    %v1591 = vshll.u32 2475754826, %v1585
    %v1592 = vshrl.u32 2131351028, %v1586
    %v1593 = vor.u32 %v1591, %v1592
    %v1594 = vshll.u32 2131351028, %v1585
    %v1595 = vshrl.u32 2102212464, %v1586
    %v1596 = vor.u32 %v1594, %v1595
    %v1597 = vshll.u32 2102212464, %v1585
    %v1598 = vshrl.u32 920167782, %v1586
    %v1599 = vor.u32 %v1597, %v1598
    %v1600 = vshll.u32 920167782, %v1585
    %v1601 = vshrl.u32 1326507024, %v1586
    %v1602 = vor.u32 %v1600, %v1601
    %vm1603 = vcmp.lt.s32.totalorder %v1584, 1
    %vm1604 = vcmp.lt.s32.totalorder %v1584, 2
    %vm1605 = vcmp.lt.s32.totalorder %v1584, 3
    %vm1606 = vcmp.lt.s32.totalorder %v1584, 4
    %v1607 = vsel %vm1603, %v1587, %v1590
    %v1608 = vsel %vm1606, %v1596, 2102212464
    %v1609 = vsel %vm1605, %v1593, %v1608
    %v1610 = vsel %vm1604, %v1607, %v1609
    %v1611 = vsel %vm1603, %v1590, %v1593
    %v1612 = vsel %vm1606, %v1599, 920167782
    %v1613 = vsel %vm1605, %v1596, %v1612
    %v1614 = vsel %vm1604, %v1611, %v1613
    %v1615 = vsel %vm1603, %v1593, %v1596
    %v1616 = vsel %vm1606, %v1602, 1326507024
    %v1617 = vsel %vm1605, %v1599, %v1616
    %v1618 = vsel %vm1604, %v1615, %v1617
    %v1619 = vshll.u32 %v1579, 8
    %v1620 = vmul.u32.u64.compose %v1619, %v1618
    %v1621 = vextract.low.u32 %v1620
    %v1622 = vextract.high.u32 %v1620
    %v1623 = vmul.u32.u64.compose %v1619, %v1614
    %v1624 = vextract.low.u32 %v1623
    %v1625 = vextract.high.u32 %v1623
    %v1626 = vmul.u32 %v1619, %v1610
    %v1627 = vadd.s32 %v1622, %v1624
    %vm1628 = vc.u32 %v1622, %v1624
    %v1629 = vadd.s32 %v1625, 1
    %v1630 = vsel %vm1628, %v1629, %v1625
    %v1631 = vadd.s32 %v1626, %v1630
    %v1632 = vadd.s32 %v1631, 536870912
    %v1633 = vshrl.u32 %v1632, 30
    %v1634 = vshll.u32 %v1633, 30
    %v1635 = vsub.s32 %v1631, %v1634
    %vm1636 = vcmp.lt.s32.totalorder %v1635, 0
    %v1637 = vsub.s32 0, %v1635
    %v1638 = vsel %vm1636, %v1637, %v1635
    %v1639 = vclz %v1638
    %v1640 = vsub.s32 %v1639, 2
    %vm1641 = vcmp.gt.s32.totalorder 0, %v1640
    %v1642 = vsel %vm1641, 0, %v1640
    %v1643 = vsub.s32 32, %v1642
    %v1644 = vshll.u32 %v1635, %v1642
    %v1645 = vshrl.u32 %v1627, %v1643
    %v1646 = vor.u32 %v1644, %v1645
    %v1647 = vsub.s32 4294967266, %v1642
    %v1648 = vadd.s32 %v1647, 127
    %v1649 = vshll.u32 %v1648, 23
    %v1650 = vor.u32 4788187, %v1649
    %v1651 = vand.u32 2147483647, %v1650
    %v1653 = vcvt.s32.f32 %v1646
    %v1654 = vmul.f32 %v1653, %v1651
    %v1655 = vxor.u32 %v1654, 2147483648
    %v1656 = vsel %vm1573, %v1655, %v1654
    %v1657 = vsub.s32 4, %v1633
    %v1658 = vsel %vm1573, %v1657, %v1633
    %v1659 = vsel %vm1572, %v1569, %v1656
    %v1660 = vsel %vm1572, 0, %v1658
    %v1661 = vcosq.f32.pop %v1659
    %v1662 = vsinq.f32.pop %v1659
    %vm1663 = vweird.f32 %v1569
    %v1664 = vadd.s32 %v1660, 3
    %v1665 = vand.u32 %v1664, 3
    %vm1666 = vcmp.lt.s32.totalorder %v1665, 2
    %vm1667 = vcmp.eq.s32.totalorder %v1665, 0
    %v1668 = vxor.u32 %v1662, 2147483648
    %v1669 = vsel %vm1667, %v1661, %v1668
    %vm1670 = vcmp.eq.s32.totalorder %v1665, 2
    %v1671 = vxor.u32 %v1661, 2147483648
    %v1672 = vsel %vm1670, %v1671, %v1662
    %v1673 = vsel %vm1666, %v1669, %v1672
    %v1674 = vsel %vm1663, nan, %v1673
    %v1675 = vand.u32 2147483647, %v1570
    %vm1676 = vcmp.le.f32.partialorder %v1675, 0.7853982
    %vm1677 = vcmp.lt.s32.totalorder %v1570, 0
    %v1678 = vand.u32 %v1570, 2139095040
    %v1679 = vshrl.u32 %v1678, 23
    %v1680 = vsub.s32 %v1679, 127
    %v1681 = vand.u32 2147483647, %v1570
    %v1682 = vand.u32 %v1681, 8388607
    %v1683 = vor.u32 %v1682, 8388608
    %v1684 = vsub.s32 0, %v1683
    %v1685 = vadd.s32 %v1680, 1
    %vm1686 = vcmp.gt.s32.totalorder %v1685, 0
    %v1687 = vsel %vm1686, %v1685, 0
    %v1688 = vshrl.u32 %v1687, 5
    %v1689 = vand.u32 %v1687, 31
    %v1690 = vsub.s32 32, %v1689
    %v1691 = vshrl.u32 683565275, %v1690
    %v1692 = vshll.u32 683565275, %v1689
    %v1693 = vshrl.u32 2475754826, %v1690
    %v1694 = vor.u32 %v1692, %v1693
    %v1695 = vshll.u32 2475754826, %v1689
    %v1696 = vshrl.u32 2131351028, %v1690
    %v1697 = vor.u32 %v1695, %v1696
    %v1698 = vshll.u32 2131351028, %v1689
    %v1699 = vshrl.u32 2102212464, %v1690
    %v1700 = vor.u32 %v1698, %v1699
    %v1701 = vshll.u32 2102212464, %v1689
    %v1702 = vshrl.u32 920167782, %v1690
    %v1703 = vor.u32 %v1701, %v1702
    %v1704 = vshll.u32 920167782, %v1689
    %v1705 = vshrl.u32 1326507024, %v1690
    %v1706 = vor.u32 %v1704, %v1705
    %vm1707 = vcmp.lt.s32.totalorder %v1688, 1
    %vm1708 = vcmp.lt.s32.totalorder %v1688, 2
    %vm1709 = vcmp.lt.s32.totalorder %v1688, 3
    %vm1710 = vcmp.lt.s32.totalorder %v1688, 4
    %v1711 = vsel %vm1707, %v1691, %v1694
    %v1712 = vsel %vm1710, %v1700, 2102212464
    %v1713 = vsel %vm1709, %v1697, %v1712
    %v1714 = vsel %vm1708, %v1711, %v1713
    %v1715 = vsel %vm1707, %v1694, %v1697
    %v1716 = vsel %vm1710, %v1703, 920167782
    %v1717 = vsel %vm1709, %v1700, %v1716
    %v1718 = vsel %vm1708, %v1715, %v1717
    %v1719 = vsel %vm1707, %v1697, %v1700
    %v1720 = vsel %vm1710, %v1706, 1326507024
    %v1721 = vsel %vm1709, %v1703, %v1720
    %v1722 = vsel %vm1708, %v1719, %v1721
    %v1723 = vshll.u32 %v1683, 8
    %v1724 = vmul.u32.u64.compose %v1723, %v1722
    %v1725 = vextract.low.u32 %v1724
    %v1726 = vextract.high.u32 %v1724
    %v1727 = vmul.u32.u64.compose %v1723, %v1718
    %v1728 = vextract.low.u32 %v1727
    %v1729 = vextract.high.u32 %v1727
    %v1730 = vmul.u32 %v1723, %v1714
    %v1731 = vadd.s32 %v1726, %v1728
    %vm1732 = vc.u32 %v1726, %v1728
    %v1733 = vadd.s32 %v1729, 1
    %v1734 = vsel %vm1732, %v1733, %v1729
    %v1735 = vadd.s32 %v1730, %v1734
    %v1736 = vadd.s32 %v1735, 536870912
    %v1737 = vshrl.u32 %v1736, 30
    %v1738 = vshll.u32 %v1737, 30
    %v1739 = vsub.s32 %v1735, %v1738
    %vm1740 = vcmp.lt.s32.totalorder %v1739, 0
    %v1741 = vsub.s32 0, %v1739
    %v1742 = vsel %vm1740, %v1741, %v1739
    %v1743 = vclz %v1742
    %v1744 = vsub.s32 %v1743, 2
    %vm1745 = vcmp.gt.s32.totalorder 0, %v1744
    %v1746 = vsel %vm1745, 0, %v1744
    %v1747 = vsub.s32 32, %v1746
    %v1748 = vshll.u32 %v1739, %v1746
    %v1749 = vshrl.u32 %v1731, %v1747
    %v1750 = vor.u32 %v1748, %v1749
    %v1751 = vsub.s32 4294967266, %v1746
    %v1752 = vadd.s32 %v1751, 127
    %v1753 = vshll.u32 %v1752, 23
    %v1754 = vor.u32 4788187, %v1753
    %v1755 = vand.u32 2147483647, %v1754
    %v1757 = vcvt.s32.f32 %v1750
    %v1758 = vmul.f32 %v1757, %v1755
    %v1759 = vxor.u32 %v1758, 2147483648
    %v1760 = vsel %vm1677, %v1759, %v1758
    %v1761 = vsub.s32 4, %v1737
    %v1762 = vsel %vm1677, %v1761, %v1737
    %v1763 = vsel %vm1676, %v1570, %v1760
    %v1764 = vsel %vm1676, 0, %v1762
    %v1765 = vcosq.f32.pop %v1763
    %v1766 = vsinq.f32.pop %v1763
    %vm1767 = vweird.f32 %v1570
    %v1768 = vadd.s32 %v1764, 3
    %v1769 = vand.u32 %v1768, 3
    %vm1770 = vcmp.lt.s32.totalorder %v1769, 2
    %vm1771 = vcmp.eq.s32.totalorder %v1769, 0
    %v1772 = vxor.u32 %v1766, 2147483648
    %v1773 = vsel %vm1771, %v1765, %v1772
    %vm1774 = vcmp.eq.s32.totalorder %v1769, 2
    %v1775 = vxor.u32 %v1765, 2147483648
    %v1776 = vsel %vm1774, %v1775, %v1766
    %v1777 = vsel %vm1770, %v1773, %v1776
    %v1778 = vsel %vm1767, nan, %v1777
    %1781 = vrot.lane.b32.xlu0 %v1674, 24
    %v1782 = vpop.permute.xlu0 %1781
    %1783 = vrot.lane.b32.xlu0 %v1778, 24
    %v1784 = vpop.permute.xlu0 %1783
    %vm1787 = vcmask 220352
    %1788 = vst.msk [vmem:[#allocation2] sm:$0xff] %vm1787, %v1782
    %1789 = vst.msk [vmem:[#allocation2 + $0x8] sm:$0xff] %vm1787, %v1784
    %v1790 = vmul.f32 %v9, 50.265484
    %v1791 = vmul.f32 %v10, 50.265484
    %v1792 = vadd.f32 %v1790, 0.0
    %v1793 = vadd.f32 %v1791, 0.0
    %v1794 = vand.u32 2147483647, %v1792
    %vm1795 = vcmp.le.f32.partialorder %v1794, 0.7853982
    %vm1796 = vcmp.lt.s32.totalorder %v1792, 0
    %v1797 = vand.u32 %v1792, 2139095040
    %v1798 = vshrl.u32 %v1797, 23
    %v1799 = vsub.s32 %v1798, 127
    %v1800 = vand.u32 2147483647, %v1792
    %v1801 = vand.u32 %v1800, 8388607
    %v1802 = vor.u32 %v1801, 8388608
    %v1803 = vsub.s32 0, %v1802
    %v1804 = vadd.s32 %v1799, 1
    %vm1805 = vcmp.gt.s32.totalorder %v1804, 0
    %v1806 = vsel %vm1805, %v1804, 0
    %v1807 = vshrl.u32 %v1806, 5
    %v1808 = vand.u32 %v1806, 31
    %v1809 = vsub.s32 32, %v1808
    %v1810 = vshrl.u32 683565275, %v1809
    %v1811 = vshll.u32 683565275, %v1808
    %v1812 = vshrl.u32 2475754826, %v1809
    %v1813 = vor.u32 %v1811, %v1812
    %v1814 = vshll.u32 2475754826, %v1808
    %v1815 = vshrl.u32 2131351028, %v1809
    %v1816 = vor.u32 %v1814, %v1815
    %v1817 = vshll.u32 2131351028, %v1808
    %v1818 = vshrl.u32 2102212464, %v1809
    %v1819 = vor.u32 %v1817, %v1818
    %v1820 = vshll.u32 2102212464, %v1808
    %v1821 = vshrl.u32 920167782, %v1809
    %v1822 = vor.u32 %v1820, %v1821
    %v1823 = vshll.u32 920167782, %v1808
    %v1824 = vshrl.u32 1326507024, %v1809
    %v1825 = vor.u32 %v1823, %v1824
    %vm1826 = vcmp.lt.s32.totalorder %v1807, 1
    %vm1827 = vcmp.lt.s32.totalorder %v1807, 2
    %vm1828 = vcmp.lt.s32.totalorder %v1807, 3
    %vm1829 = vcmp.lt.s32.totalorder %v1807, 4
    %v1830 = vsel %vm1826, %v1810, %v1813
    %v1831 = vsel %vm1829, %v1819, 2102212464
    %v1832 = vsel %vm1828, %v1816, %v1831
    %v1833 = vsel %vm1827, %v1830, %v1832
    %v1834 = vsel %vm1826, %v1813, %v1816
    %v1835 = vsel %vm1829, %v1822, 920167782
    %v1836 = vsel %vm1828, %v1819, %v1835
    %v1837 = vsel %vm1827, %v1834, %v1836
    %v1838 = vsel %vm1826, %v1816, %v1819
    %v1839 = vsel %vm1829, %v1825, 1326507024
    %v1840 = vsel %vm1828, %v1822, %v1839
    %v1841 = vsel %vm1827, %v1838, %v1840
    %v1842 = vshll.u32 %v1802, 8
    %v1843 = vmul.u32.u64.compose %v1842, %v1841
    %v1844 = vextract.low.u32 %v1843
    %v1845 = vextract.high.u32 %v1843
    %v1846 = vmul.u32.u64.compose %v1842, %v1837
    %v1847 = vextract.low.u32 %v1846
    %v1848 = vextract.high.u32 %v1846
    %v1849 = vmul.u32 %v1842, %v1833
    %v1850 = vadd.s32 %v1845, %v1847
    %vm1851 = vc.u32 %v1845, %v1847
    %v1852 = vadd.s32 %v1848, 1
    %v1853 = vsel %vm1851, %v1852, %v1848
    %v1854 = vadd.s32 %v1849, %v1853
    %v1855 = vadd.s32 %v1854, 536870912
    %v1856 = vshrl.u32 %v1855, 30
    %v1857 = vshll.u32 %v1856, 30
    %v1858 = vsub.s32 %v1854, %v1857
    %vm1859 = vcmp.lt.s32.totalorder %v1858, 0
    %v1860 = vsub.s32 0, %v1858
    %v1861 = vsel %vm1859, %v1860, %v1858
    %v1862 = vclz %v1861
    %v1863 = vsub.s32 %v1862, 2
    %vm1864 = vcmp.gt.s32.totalorder 0, %v1863
    %v1865 = vsel %vm1864, 0, %v1863
    %v1866 = vsub.s32 32, %v1865
    %v1867 = vshll.u32 %v1858, %v1865
    %v1868 = vshrl.u32 %v1850, %v1866
    %v1869 = vor.u32 %v1867, %v1868
    %v1870 = vsub.s32 4294967266, %v1865
    %v1871 = vadd.s32 %v1870, 127
    %v1872 = vshll.u32 %v1871, 23
    %v1873 = vor.u32 4788187, %v1872
    %v1874 = vand.u32 2147483647, %v1873
    %v1876 = vcvt.s32.f32 %v1869
    %v1877 = vmul.f32 %v1876, %v1874
    %v1878 = vxor.u32 %v1877, 2147483648
    %v1879 = vsel %vm1796, %v1878, %v1877
    %v1880 = vsub.s32 4, %v1856
    %v1881 = vsel %vm1796, %v1880, %v1856
    %v1882 = vsel %vm1795, %v1792, %v1879
    %v1883 = vsel %vm1795, 0, %v1881
    %v1884 = vcosq.f32.pop %v1882
    %v1885 = vsinq.f32.pop %v1882
    %vm1886 = vweird.f32 %v1792
    %v1887 = vadd.s32 %v1883, 3
    %v1888 = vand.u32 %v1887, 3
    %vm1889 = vcmp.lt.s32.totalorder %v1888, 2
    %vm1890 = vcmp.eq.s32.totalorder %v1888, 0
    %v1891 = vxor.u32 %v1885, 2147483648
    %v1892 = vsel %vm1890, %v1884, %v1891
    %vm1893 = vcmp.eq.s32.totalorder %v1888, 2
    %v1894 = vxor.u32 %v1884, 2147483648
    %v1895 = vsel %vm1893, %v1894, %v1885
    %v1896 = vsel %vm1889, %v1892, %v1895
    %v1897 = vsel %vm1886, nan, %v1896
    %v1898 = vand.u32 2147483647, %v1793
    %vm1899 = vcmp.le.f32.partialorder %v1898, 0.7853982
    %vm1900 = vcmp.lt.s32.totalorder %v1793, 0
    %v1901 = vand.u32 %v1793, 2139095040
    %v1902 = vshrl.u32 %v1901, 23
    %v1903 = vsub.s32 %v1902, 127
    %v1904 = vand.u32 2147483647, %v1793
    %v1905 = vand.u32 %v1904, 8388607
    %v1906 = vor.u32 %v1905, 8388608
    %v1907 = vsub.s32 0, %v1906
    %v1908 = vadd.s32 %v1903, 1
    %vm1909 = vcmp.gt.s32.totalorder %v1908, 0
    %v1910 = vsel %vm1909, %v1908, 0
    %v1911 = vshrl.u32 %v1910, 5
    %v1912 = vand.u32 %v1910, 31
    %v1913 = vsub.s32 32, %v1912
    %v1914 = vshrl.u32 683565275, %v1913
    %v1915 = vshll.u32 683565275, %v1912
    %v1916 = vshrl.u32 2475754826, %v1913
    %v1917 = vor.u32 %v1915, %v1916
    %v1918 = vshll.u32 2475754826, %v1912
    %v1919 = vshrl.u32 2131351028, %v1913
    %v1920 = vor.u32 %v1918, %v1919
    %v1921 = vshll.u32 2131351028, %v1912
    %v1922 = vshrl.u32 2102212464, %v1913
    %v1923 = vor.u32 %v1921, %v1922
    %v1924 = vshll.u32 2102212464, %v1912
    %v1925 = vshrl.u32 920167782, %v1913
    %v1926 = vor.u32 %v1924, %v1925
    %v1927 = vshll.u32 920167782, %v1912
    %v1928 = vshrl.u32 1326507024, %v1913
    %v1929 = vor.u32 %v1927, %v1928
    %vm1930 = vcmp.lt.s32.totalorder %v1911, 1
    %vm1931 = vcmp.lt.s32.totalorder %v1911, 2
    %vm1932 = vcmp.lt.s32.totalorder %v1911, 3
    %vm1933 = vcmp.lt.s32.totalorder %v1911, 4
    %v1934 = vsel %vm1930, %v1914, %v1917
    %v1935 = vsel %vm1933, %v1923, 2102212464
    %v1936 = vsel %vm1932, %v1920, %v1935
    %v1937 = vsel %vm1931, %v1934, %v1936
    %v1938 = vsel %vm1930, %v1917, %v1920
    %v1939 = vsel %vm1933, %v1926, 920167782
    %v1940 = vsel %vm1932, %v1923, %v1939
    %v1941 = vsel %vm1931, %v1938, %v1940
    %v1942 = vsel %vm1930, %v1920, %v1923
    %v1943 = vsel %vm1933, %v1929, 1326507024
    %v1944 = vsel %vm1932, %v1926, %v1943
    %v1945 = vsel %vm1931, %v1942, %v1944
    %v1946 = vshll.u32 %v1906, 8
    %v1947 = vmul.u32.u64.compose %v1946, %v1945
    %v1948 = vextract.low.u32 %v1947
    %v1949 = vextract.high.u32 %v1947
    %v1950 = vmul.u32.u64.compose %v1946, %v1941
    %v1951 = vextract.low.u32 %v1950
    %v1952 = vextract.high.u32 %v1950
    %v1953 = vmul.u32 %v1946, %v1937
    %v1954 = vadd.s32 %v1949, %v1951
    %vm1955 = vc.u32 %v1949, %v1951
    %v1956 = vadd.s32 %v1952, 1
    %v1957 = vsel %vm1955, %v1956, %v1952
    %v1958 = vadd.s32 %v1953, %v1957
    %v1959 = vadd.s32 %v1958, 536870912
    %v1960 = vshrl.u32 %v1959, 30
    %v1961 = vshll.u32 %v1960, 30
    %v1962 = vsub.s32 %v1958, %v1961
    %vm1963 = vcmp.lt.s32.totalorder %v1962, 0
    %v1964 = vsub.s32 0, %v1962
    %v1965 = vsel %vm1963, %v1964, %v1962
    %v1966 = vclz %v1965
    %v1967 = vsub.s32 %v1966, 2
    %vm1968 = vcmp.gt.s32.totalorder 0, %v1967
    %v1969 = vsel %vm1968, 0, %v1967
    %v1970 = vsub.s32 32, %v1969
    %v1971 = vshll.u32 %v1962, %v1969
    %v1972 = vshrl.u32 %v1954, %v1970
    %v1973 = vor.u32 %v1971, %v1972
    %v1974 = vsub.s32 4294967266, %v1969
    %v1975 = vadd.s32 %v1974, 127
    %v1976 = vshll.u32 %v1975, 23
    %v1977 = vor.u32 4788187, %v1976
    %v1978 = vand.u32 2147483647, %v1977
    %v1980 = vcvt.s32.f32 %v1973
    %v1981 = vmul.f32 %v1980, %v1978
    %v1982 = vxor.u32 %v1981, 2147483648
    %v1983 = vsel %vm1900, %v1982, %v1981
    %v1984 = vsub.s32 4, %v1960
    %v1985 = vsel %vm1900, %v1984, %v1960
    %v1986 = vsel %vm1899, %v1793, %v1983
    %v1987 = vsel %vm1899, 0, %v1985
    %v1988 = vcosq.f32.pop %v1986
    %v1989 = vsinq.f32.pop %v1986
    %vm1990 = vweird.f32 %v1793
    %v1991 = vadd.s32 %v1987, 3
    %v1992 = vand.u32 %v1991, 3
    %vm1993 = vcmp.lt.s32.totalorder %v1992, 2
    %vm1994 = vcmp.eq.s32.totalorder %v1992, 0
    %v1995 = vxor.u32 %v1989, 2147483648
    %v1996 = vsel %vm1994, %v1988, %v1995
    %vm1997 = vcmp.eq.s32.totalorder %v1992, 2
    %v1998 = vxor.u32 %v1988, 2147483648
    %v1999 = vsel %vm1997, %v1998, %v1989
    %v2000 = vsel %vm1993, %v1996, %v1999
    %v2001 = vsel %vm1990, nan, %v2000
    %2004 = vrot.lane.b32.xlu0 %v1897, 27
    %v2005 = vpop.permute.xlu0 %2004
    %2006 = vrot.lane.b32.xlu0 %v2001, 27
    %v2007 = vpop.permute.xlu0 %2006
    %vm2010 = vcmask 244952
    %2011 = vst.msk [vmem:[#allocation2] sm:$0xff] %vm2010, %v2005
    %2012 = vst.msk [vmem:[#allocation2 + $0x8] sm:$0xff] %vm2010, %v2007
    %v2013 = vadd.f32 %v1790, 1.5707964
    %v2014 = vadd.f32 %v1791, 1.5707964
    %v2015 = vand.u32 2147483647, %v2013
    %vm2016 = vcmp.le.f32.partialorder %v2015, 0.7853982
    %vm2017 = vcmp.lt.s32.totalorder %v2013, 0
    %v2018 = vand.u32 %v2013, 2139095040
    %v2019 = vshrl.u32 %v2018, 23
    %v2020 = vsub.s32 %v2019, 127
    %v2021 = vand.u32 2147483647, %v2013
    %v2022 = vand.u32 %v2021, 8388607
    %v2023 = vor.u32 %v2022, 8388608
    %v2024 = vsub.s32 0, %v2023
    %v2025 = vadd.s32 %v2020, 1
    %vm2026 = vcmp.gt.s32.totalorder %v2025, 0
    %v2027 = vsel %vm2026, %v2025, 0
    %v2028 = vshrl.u32 %v2027, 5
    %v2029 = vand.u32 %v2027, 31
    %v2030 = vsub.s32 32, %v2029
    %v2031 = vshrl.u32 683565275, %v2030
    %v2032 = vshll.u32 683565275, %v2029
    %v2033 = vshrl.u32 2475754826, %v2030
    %v2034 = vor.u32 %v2032, %v2033
    %v2035 = vshll.u32 2475754826, %v2029
    %v2036 = vshrl.u32 2131351028, %v2030
    %v2037 = vor.u32 %v2035, %v2036
    %v2038 = vshll.u32 2131351028, %v2029
    %v2039 = vshrl.u32 2102212464, %v2030
    %v2040 = vor.u32 %v2038, %v2039
    %v2041 = vshll.u32 2102212464, %v2029
    %v2042 = vshrl.u32 920167782, %v2030
    %v2043 = vor.u32 %v2041, %v2042
    %v2044 = vshll.u32 920167782, %v2029
    %v2045 = vshrl.u32 1326507024, %v2030
    %v2046 = vor.u32 %v2044, %v2045
    %vm2047 = vcmp.lt.s32.totalorder %v2028, 1
    %vm2048 = vcmp.lt.s32.totalorder %v2028, 2
    %vm2049 = vcmp.lt.s32.totalorder %v2028, 3
    %vm2050 = vcmp.lt.s32.totalorder %v2028, 4
    %v2051 = vsel %vm2047, %v2031, %v2034
    %v2052 = vsel %vm2050, %v2040, 2102212464
    %v2053 = vsel %vm2049, %v2037, %v2052
    %v2054 = vsel %vm2048, %v2051, %v2053
    %v2055 = vsel %vm2047, %v2034, %v2037
    %v2056 = vsel %vm2050, %v2043, 920167782
    %v2057 = vsel %vm2049, %v2040, %v2056
    %v2058 = vsel %vm2048, %v2055, %v2057
    %v2059 = vsel %vm2047, %v2037, %v2040
    %v2060 = vsel %vm2050, %v2046, 1326507024
    %v2061 = vsel %vm2049, %v2043, %v2060
    %v2062 = vsel %vm2048, %v2059, %v2061
    %v2063 = vshll.u32 %v2023, 8
    %v2064 = vmul.u32.u64.compose %v2063, %v2062
    %v2065 = vextract.low.u32 %v2064
    %v2066 = vextract.high.u32 %v2064
    %v2067 = vmul.u32.u64.compose %v2063, %v2058
    %v2068 = vextract.low.u32 %v2067
    %v2069 = vextract.high.u32 %v2067
    %v2070 = vmul.u32 %v2063, %v2054
    %v2071 = vadd.s32 %v2066, %v2068
    %vm2072 = vc.u32 %v2066, %v2068
    %v2073 = vadd.s32 %v2069, 1
    %v2074 = vsel %vm2072, %v2073, %v2069
    %v2075 = vadd.s32 %v2070, %v2074
    %v2076 = vadd.s32 %v2075, 536870912
    %v2077 = vshrl.u32 %v2076, 30
    %v2078 = vshll.u32 %v2077, 30
    %v2079 = vsub.s32 %v2075, %v2078
    %vm2080 = vcmp.lt.s32.totalorder %v2079, 0
    %v2081 = vsub.s32 0, %v2079
    %v2082 = vsel %vm2080, %v2081, %v2079
    %v2083 = vclz %v2082
    %v2084 = vsub.s32 %v2083, 2
    %vm2085 = vcmp.gt.s32.totalorder 0, %v2084
    %v2086 = vsel %vm2085, 0, %v2084
    %v2087 = vsub.s32 32, %v2086
    %v2088 = vshll.u32 %v2079, %v2086
    %v2089 = vshrl.u32 %v2071, %v2087
    %v2090 = vor.u32 %v2088, %v2089
    %v2091 = vsub.s32 4294967266, %v2086
    %v2092 = vadd.s32 %v2091, 127
    %v2093 = vshll.u32 %v2092, 23
    %v2094 = vor.u32 4788187, %v2093
    %v2095 = vand.u32 2147483647, %v2094
    %v2097 = vcvt.s32.f32 %v2090
    %v2098 = vmul.f32 %v2097, %v2095
    %v2099 = vxor.u32 %v2098, 2147483648
    %v2100 = vsel %vm2017, %v2099, %v2098
    %v2101 = vsub.s32 4, %v2077
    %v2102 = vsel %vm2017, %v2101, %v2077
    %v2103 = vsel %vm2016, %v2013, %v2100
    %v2104 = vsel %vm2016, 0, %v2102
    %v2105 = vcosq.f32.pop %v2103
    %v2106 = vsinq.f32.pop %v2103
    %vm2107 = vweird.f32 %v2013
    %v2108 = vadd.s32 %v2104, 3
    %v2109 = vand.u32 %v2108, 3
    %vm2110 = vcmp.lt.s32.totalorder %v2109, 2
    %vm2111 = vcmp.eq.s32.totalorder %v2109, 0
    %v2112 = vxor.u32 %v2106, 2147483648
    %v2113 = vsel %vm2111, %v2105, %v2112
    %vm2114 = vcmp.eq.s32.totalorder %v2109, 2
    %v2115 = vxor.u32 %v2105, 2147483648
    %v2116 = vsel %vm2114, %v2115, %v2106
    %v2117 = vsel %vm2110, %v2113, %v2116
    %v2118 = vsel %vm2107, nan, %v2117
    %v2119 = vand.u32 2147483647, %v2014
    %vm2120 = vcmp.le.f32.partialorder %v2119, 0.7853982
    %vm2121 = vcmp.lt.s32.totalorder %v2014, 0
    %v2122 = vand.u32 %v2014, 2139095040
    %v2123 = vshrl.u32 %v2122, 23
    %v2124 = vsub.s32 %v2123, 127
    %v2125 = vand.u32 2147483647, %v2014
    %v2126 = vand.u32 %v2125, 8388607
    %v2127 = vor.u32 %v2126, 8388608
    %v2128 = vsub.s32 0, %v2127
    %v2129 = vadd.s32 %v2124, 1
    %vm2130 = vcmp.gt.s32.totalorder %v2129, 0
    %v2131 = vsel %vm2130, %v2129, 0
    %v2132 = vshrl.u32 %v2131, 5
    %v2133 = vand.u32 %v2131, 31
    %v2134 = vsub.s32 32, %v2133
    %v2135 = vshrl.u32 683565275, %v2134
    %v2136 = vshll.u32 683565275, %v2133
    %v2137 = vshrl.u32 2475754826, %v2134
    %v2138 = vor.u32 %v2136, %v2137
    %v2139 = vshll.u32 2475754826, %v2133
    %v2140 = vshrl.u32 2131351028, %v2134
    %v2141 = vor.u32 %v2139, %v2140
    %v2142 = vshll.u32 2131351028, %v2133
    %v2143 = vshrl.u32 2102212464, %v2134
    %v2144 = vor.u32 %v2142, %v2143
    %v2145 = vshll.u32 2102212464, %v2133
    %v2146 = vshrl.u32 920167782, %v2134
    %v2147 = vor.u32 %v2145, %v2146
    %v2148 = vshll.u32 920167782, %v2133
    %v2149 = vshrl.u32 1326507024, %v2134
    %v2150 = vor.u32 %v2148, %v2149
    %vm2151 = vcmp.lt.s32.totalorder %v2132, 1
    %vm2152 = vcmp.lt.s32.totalorder %v2132, 2
    %vm2153 = vcmp.lt.s32.totalorder %v2132, 3
    %vm2154 = vcmp.lt.s32.totalorder %v2132, 4
    %v2155 = vsel %vm2151, %v2135, %v2138
    %v2156 = vsel %vm2154, %v2144, 2102212464
    %v2157 = vsel %vm2153, %v2141, %v2156
    %v2158 = vsel %vm2152, %v2155, %v2157
    %v2159 = vsel %vm2151, %v2138, %v2141
    %v2160 = vsel %vm2154, %v2147, 920167782
    %v2161 = vsel %vm2153, %v2144, %v2160
    %v2162 = vsel %vm2152, %v2159, %v2161
    %v2163 = vsel %vm2151, %v2141, %v2144
    %v2164 = vsel %vm2154, %v2150, 1326507024
    %v2165 = vsel %vm2153, %v2147, %v2164
    %v2166 = vsel %vm2152, %v2163, %v2165
    %v2167 = vshll.u32 %v2127, 8
    %v2168 = vmul.u32.u64.compose %v2167, %v2166
    %v2169 = vextract.low.u32 %v2168
    %v2170 = vextract.high.u32 %v2168
    %v2171 = vmul.u32.u64.compose %v2167, %v2162
    %v2172 = vextract.low.u32 %v2171
    %v2173 = vextract.high.u32 %v2171
    %v2174 = vmul.u32 %v2167, %v2158
    %v2175 = vadd.s32 %v2170, %v2172
    %vm2176 = vc.u32 %v2170, %v2172
    %v2177 = vadd.s32 %v2173, 1
    %v2178 = vsel %vm2176, %v2177, %v2173
    %v2179 = vadd.s32 %v2174, %v2178
    %v2180 = vadd.s32 %v2179, 536870912
    %v2181 = vshrl.u32 %v2180, 30
    %v2182 = vshll.u32 %v2181, 30
    %v2183 = vsub.s32 %v2179, %v2182
    %vm2184 = vcmp.lt.s32.totalorder %v2183, 0
    %v2185 = vsub.s32 0, %v2183
    %v2186 = vsel %vm2184, %v2185, %v2183
    %v2187 = vclz %v2186
    %v2188 = vsub.s32 %v2187, 2
    %vm2189 = vcmp.gt.s32.totalorder 0, %v2188
    %v2190 = vsel %vm2189, 0, %v2188
    %v2191 = vsub.s32 32, %v2190
    %v2192 = vshll.u32 %v2183, %v2190
    %v2193 = vshrl.u32 %v2175, %v2191
    %v2194 = vor.u32 %v2192, %v2193
    %v2195 = vsub.s32 4294967266, %v2190
    %v2196 = vadd.s32 %v2195, 127
    %v2197 = vshll.u32 %v2196, 23
    %v2198 = vor.u32 4788187, %v2197
    %v2199 = vand.u32 2147483647, %v2198
    %v2201 = vcvt.s32.f32 %v2194
    %v2202 = vmul.f32 %v2201, %v2199
    %v2203 = vxor.u32 %v2202, 2147483648
    %v2204 = vsel %vm2121, %v2203, %v2202
    %v2205 = vsub.s32 4, %v2181
    %v2206 = vsel %vm2121, %v2205, %v2181
    %v2207 = vsel %vm2120, %v2014, %v2204
    %v2208 = vsel %vm2120, 0, %v2206
    %v2209 = vcosq.f32.pop %v2207
    %v2210 = vsinq.f32.pop %v2207
    %vm2211 = vweird.f32 %v2014
    %v2212 = vadd.s32 %v2208, 3
    %v2213 = vand.u32 %v2212, 3
    %vm2214 = vcmp.lt.s32.totalorder %v2213, 2
    %vm2215 = vcmp.eq.s32.totalorder %v2213, 0
    %v2216 = vxor.u32 %v2210, 2147483648
    %v2217 = vsel %vm2215, %v2209, %v2216
    %vm2218 = vcmp.eq.s32.totalorder %v2213, 2
    %v2219 = vxor.u32 %v2209, 2147483648
    %v2220 = vsel %vm2218, %v2219, %v2210
    %v2221 = vsel %vm2214, %v2217, %v2220
    %v2222 = vsel %vm2211, nan, %v2221
    %2225 = vrot.lane.b32.xlu0 %v2118, 30
    %v2226 = vpop.permute.xlu0 %2225
    %2227 = vrot.lane.b32.xlu0 %v2222, 30
    %v2228 = vpop.permute.xlu0 %2227
    %vm2231 = vcmask 269552
    %2232 = vst.msk [vmem:[#allocation2] sm:$0xff] %vm2231, %v2226
    %2233 = vst.msk [vmem:[#allocation2 + $0x8] sm:$0xff] %vm2231, %v2228
    %v2234 = vmul.f32 %v9, 100.53097
    %v2235 = vmul.f32 %v10, 100.53097
    %v2236 = vadd.f32 %v2234, 0.0
    %v2237 = vadd.f32 %v2235, 0.0
    %v2238 = vand.u32 2147483647, %v2236
    %vm2239 = vcmp.le.f32.partialorder %v2238, 0.7853982
    %vm2240 = vcmp.lt.s32.totalorder %v2236, 0
    %v2241 = vand.u32 %v2236, 2139095040
    %v2242 = vshrl.u32 %v2241, 23
    %v2243 = vsub.s32 %v2242, 127
    %v2244 = vand.u32 2147483647, %v2236
    %v2245 = vand.u32 %v2244, 8388607
    %v2246 = vor.u32 %v2245, 8388608
    %v2247 = vsub.s32 0, %v2246
    %v2248 = vadd.s32 %v2243, 1
    %vm2249 = vcmp.gt.s32.totalorder %v2248, 0
    %v2250 = vsel %vm2249, %v2248, 0
    %v2251 = vshrl.u32 %v2250, 5
    %v2252 = vand.u32 %v2250, 31
    %v2253 = vsub.s32 32, %v2252
    %v2254 = vshrl.u32 683565275, %v2253
    %v2255 = vshll.u32 683565275, %v2252
    %v2256 = vshrl.u32 2475754826, %v2253
    %v2257 = vor.u32 %v2255, %v2256
    %v2258 = vshll.u32 2475754826, %v2252
    %v2259 = vshrl.u32 2131351028, %v2253
    %v2260 = vor.u32 %v2258, %v2259
    %v2261 = vshll.u32 2131351028, %v2252
    %v2262 = vshrl.u32 2102212464, %v2253
    %v2263 = vor.u32 %v2261, %v2262
    %v2264 = vshll.u32 2102212464, %v2252
    %v2265 = vshrl.u32 920167782, %v2253
    %v2266 = vor.u32 %v2264, %v2265
    %v2267 = vshll.u32 920167782, %v2252
    %v2268 = vshrl.u32 1326507024, %v2253
    %v2269 = vor.u32 %v2267, %v2268
    %vm2270 = vcmp.lt.s32.totalorder %v2251, 1
    %vm2271 = vcmp.lt.s32.totalorder %v2251, 2
    %vm2272 = vcmp.lt.s32.totalorder %v2251, 3
    %vm2273 = vcmp.lt.s32.totalorder %v2251, 4
    %v2274 = vsel %vm2270, %v2254, %v2257
    %v2275 = vsel %vm2273, %v2263, 2102212464
    %v2276 = vsel %vm2272, %v2260, %v2275
    %v2277 = vsel %vm2271, %v2274, %v2276
    %v2278 = vsel %vm2270, %v2257, %v2260
    %v2279 = vsel %vm2273, %v2266, 920167782
    %v2280 = vsel %vm2272, %v2263, %v2279
    %v2281 = vsel %vm2271, %v2278, %v2280
    %v2282 = vsel %vm2270, %v2260, %v2263
    %v2283 = vsel %vm2273, %v2269, 1326507024
    %v2284 = vsel %vm2272, %v2266, %v2283
    %v2285 = vsel %vm2271, %v2282, %v2284
    %v2286 = vshll.u32 %v2246, 8
    %v2287 = vmul.u32.u64.compose %v2286, %v2285
    %v2288 = vextract.low.u32 %v2287
    %v2289 = vextract.high.u32 %v2287
    %v2290 = vmul.u32.u64.compose %v2286, %v2281
    %v2291 = vextract.low.u32 %v2290
    %v2292 = vextract.high.u32 %v2290
    %v2293 = vmul.u32 %v2286, %v2277
    %v2294 = vadd.s32 %v2289, %v2291
    %vm2295 = vc.u32 %v2289, %v2291
    %v2296 = vadd.s32 %v2292, 1
    %v2297 = vsel %vm2295, %v2296, %v2292
    %v2298 = vadd.s32 %v2293, %v2297
    %v2299 = vadd.s32 %v2298, 536870912
    %v2300 = vshrl.u32 %v2299, 30
    %v2301 = vshll.u32 %v2300, 30
    %v2302 = vsub.s32 %v2298, %v2301
    %vm2303 = vcmp.lt.s32.totalorder %v2302, 0
    %v2304 = vsub.s32 0, %v2302
    %v2305 = vsel %vm2303, %v2304, %v2302
    %v2306 = vclz %v2305
    %v2307 = vsub.s32 %v2306, 2
    %vm2308 = vcmp.gt.s32.totalorder 0, %v2307
    %v2309 = vsel %vm2308, 0, %v2307
    %v2310 = vsub.s32 32, %v2309
    %v2311 = vshll.u32 %v2302, %v2309
    %v2312 = vshrl.u32 %v2294, %v2310
    %v2313 = vor.u32 %v2311, %v2312
    %v2314 = vsub.s32 4294967266, %v2309
    %v2315 = vadd.s32 %v2314, 127
    %v2316 = vshll.u32 %v2315, 23
    %v2317 = vor.u32 4788187, %v2316
    %v2318 = vand.u32 2147483647, %v2317
    %v2320 = vcvt.s32.f32 %v2313
    %v2321 = vmul.f32 %v2320, %v2318
    %v2322 = vxor.u32 %v2321, 2147483648
    %v2323 = vsel %vm2240, %v2322, %v2321
    %v2324 = vsub.s32 4, %v2300
    %v2325 = vsel %vm2240, %v2324, %v2300
    %v2326 = vsel %vm2239, %v2236, %v2323
    %v2327 = vsel %vm2239, 0, %v2325
    %v2328 = vcosq.f32.pop %v2326
    %v2329 = vsinq.f32.pop %v2326
    %vm2330 = vweird.f32 %v2236
    %v2331 = vadd.s32 %v2327, 3
    %v2332 = vand.u32 %v2331, 3
    %vm2333 = vcmp.lt.s32.totalorder %v2332, 2
    %vm2334 = vcmp.eq.s32.totalorder %v2332, 0
    %v2335 = vxor.u32 %v2329, 2147483648
    %v2336 = vsel %vm2334, %v2328, %v2335
    %vm2337 = vcmp.eq.s32.totalorder %v2332, 2
    %v2338 = vxor.u32 %v2328, 2147483648
    %v2339 = vsel %vm2337, %v2338, %v2329
    %v2340 = vsel %vm2333, %v2336, %v2339
    %v2341 = vsel %vm2330, nan, %v2340
    %v2342 = vand.u32 2147483647, %v2237
    %vm2343 = vcmp.le.f32.partialorder %v2342, 0.7853982
    %vm2344 = vcmp.lt.s32.totalorder %v2237, 0
    %v2345 = vand.u32 %v2237, 2139095040
    %v2346 = vshrl.u32 %v2345, 23
    %v2347 = vsub.s32 %v2346, 127
    %v2348 = vand.u32 2147483647, %v2237
    %v2349 = vand.u32 %v2348, 8388607
    %v2350 = vor.u32 %v2349, 8388608
    %v2351 = vsub.s32 0, %v2350
    %v2352 = vadd.s32 %v2347, 1
    %vm2353 = vcmp.gt.s32.totalorder %v2352, 0
    %v2354 = vsel %vm2353, %v2352, 0
    %v2355 = vshrl.u32 %v2354, 5
    %v2356 = vand.u32 %v2354, 31
    %v2357 = vsub.s32 32, %v2356
    %v2358 = vshrl.u32 683565275, %v2357
    %v2359 = vshll.u32 683565275, %v2356
    %v2360 = vshrl.u32 2475754826, %v2357
    %v2361 = vor.u32 %v2359, %v2360
    %v2362 = vshll.u32 2475754826, %v2356
    %v2363 = vshrl.u32 2131351028, %v2357
    %v2364 = vor.u32 %v2362, %v2363
    %v2365 = vshll.u32 2131351028, %v2356
    %v2366 = vshrl.u32 2102212464, %v2357
    %v2367 = vor.u32 %v2365, %v2366
    %v2368 = vshll.u32 2102212464, %v2356
    %v2369 = vshrl.u32 920167782, %v2357
    %v2370 = vor.u32 %v2368, %v2369
    %v2371 = vshll.u32 920167782, %v2356
    %v2372 = vshrl.u32 1326507024, %v2357
    %v2373 = vor.u32 %v2371, %v2372
    %vm2374 = vcmp.lt.s32.totalorder %v2355, 1
    %vm2375 = vcmp.lt.s32.totalorder %v2355, 2
    %vm2376 = vcmp.lt.s32.totalorder %v2355, 3
    %vm2377 = vcmp.lt.s32.totalorder %v2355, 4
    %v2378 = vsel %vm2374, %v2358, %v2361
    %v2379 = vsel %vm2377, %v2367, 2102212464
    %v2380 = vsel %vm2376, %v2364, %v2379
    %v2381 = vsel %vm2375, %v2378, %v2380
    %v2382 = vsel %vm2374, %v2361, %v2364
    %v2383 = vsel %vm2377, %v2370, 920167782
    %v2384 = vsel %vm2376, %v2367, %v2383
    %v2385 = vsel %vm2375, %v2382, %v2384
    %v2386 = vsel %vm2374, %v2364, %v2367
    %v2387 = vsel %vm2377, %v2373, 1326507024
    %v2388 = vsel %vm2376, %v2370, %v2387
    %v2389 = vsel %vm2375, %v2386, %v2388
    %v2390 = vshll.u32 %v2350, 8
    %v2391 = vmul.u32.u64.compose %v2390, %v2389
    %v2392 = vextract.low.u32 %v2391
    %v2393 = vextract.high.u32 %v2391
    %v2394 = vmul.u32.u64.compose %v2390, %v2385
    %v2395 = vextract.low.u32 %v2394
    %v2396 = vextract.high.u32 %v2394
    %v2397 = vmul.u32 %v2390, %v2381
    %v2398 = vadd.s32 %v2393, %v2395
    %vm2399 = vc.u32 %v2393, %v2395
    %v2400 = vadd.s32 %v2396, 1
    %v2401 = vsel %vm2399, %v2400, %v2396
    %v2402 = vadd.s32 %v2397, %v2401
    %v2403 = vadd.s32 %v2402, 536870912
    %v2404 = vshrl.u32 %v2403, 30
    %v2405 = vshll.u32 %v2404, 30
    %v2406 = vsub.s32 %v2402, %v2405
    %vm2407 = vcmp.lt.s32.totalorder %v2406, 0
    %v2408 = vsub.s32 0, %v2406
    %v2409 = vsel %vm2407, %v2408, %v2406
    %v2410 = vclz %v2409
    %v2411 = vsub.s32 %v2410, 2
    %vm2412 = vcmp.gt.s32.totalorder 0, %v2411
    %v2413 = vsel %vm2412, 0, %v2411
    %v2414 = vsub.s32 32, %v2413
    %v2415 = vshll.u32 %v2406, %v2413
    %v2416 = vshrl.u32 %v2398, %v2414
    %v2417 = vor.u32 %v2415, %v2416
    %v2418 = vsub.s32 4294967266, %v2413
    %v2419 = vadd.s32 %v2418, 127
    %v2420 = vshll.u32 %v2419, 23
    %v2421 = vor.u32 4788187, %v2420
    %v2422 = vand.u32 2147483647, %v2421
    %v2424 = vcvt.s32.f32 %v2417
    %v2425 = vmul.f32 %v2424, %v2422
    %v2426 = vxor.u32 %v2425, 2147483648
    %v2427 = vsel %vm2344, %v2426, %v2425
    %v2428 = vsub.s32 4, %v2404
    %v2429 = vsel %vm2344, %v2428, %v2404
    %v2430 = vsel %vm2343, %v2237, %v2427
    %v2431 = vsel %vm2343, 0, %v2429
    %v2432 = vcosq.f32.pop %v2430
    %v2433 = vsinq.f32.pop %v2430
    %vm2434 = vweird.f32 %v2237
    %v2435 = vadd.s32 %v2431, 3
    %v2436 = vand.u32 %v2435, 3
    %vm2437 = vcmp.lt.s32.totalorder %v2436, 2
    %vm2438 = vcmp.eq.s32.totalorder %v2436, 0
    %v2439 = vxor.u32 %v2433, 2147483648
    %v2440 = vsel %vm2438, %v2432, %v2439
    %vm2441 = vcmp.eq.s32.totalorder %v2436, 2
    %v2442 = vxor.u32 %v2432, 2147483648
    %v2443 = vsel %vm2441, %v2442, %v2433
    %v2444 = vsel %vm2437, %v2440, %v2443
    %v2445 = vsel %vm2434, nan, %v2444
    %2448 = vrot.lane.b32.xlu0 %v2341, 33
    %v2449 = vpop.permute.xlu0 %2448
    %2450 = vrot.lane.b32.xlu0 %v2445, 33
    %v2451 = vpop.permute.xlu0 %2450
    %vm2454 = vcmask 294152
    %2455 = vst.msk [vmem:[#allocation2] sm:$0xff] %vm2454, %v2449
    %2456 = vst.msk [vmem:[#allocation2 + $0x8] sm:$0xff] %vm2454, %v2451
    %v2457 = vadd.f32 %v2234, 1.5707964
    %v2458 = vadd.f32 %v2235, 1.5707964
    %v2459 = vand.u32 2147483647, %v2457
    %vm2460 = vcmp.le.f32.partialorder %v2459, 0.7853982
    %vm2461 = vcmp.lt.s32.totalorder %v2457, 0
    %v2462 = vand.u32 %v2457, 2139095040
    %v2463 = vshrl.u32 %v2462, 23
    %v2464 = vsub.s32 %v2463, 127
    %v2465 = vand.u32 2147483647, %v2457
    %v2466 = vand.u32 %v2465, 8388607
    %v2467 = vor.u32 %v2466, 8388608
    %v2468 = vsub.s32 0, %v2467
    %v2469 = vadd.s32 %v2464, 1
    %vm2470 = vcmp.gt.s32.totalorder %v2469, 0
    %v2471 = vsel %vm2470, %v2469, 0
    %v2472 = vshrl.u32 %v2471, 5
    %v2473 = vand.u32 %v2471, 31
    %v2474 = vsub.s32 32, %v2473
    %v2475 = vshrl.u32 683565275, %v2474
    %v2476 = vshll.u32 683565275, %v2473
    %v2477 = vshrl.u32 2475754826, %v2474
    %v2478 = vor.u32 %v2476, %v2477
    %v2479 = vshll.u32 2475754826, %v2473
    %v2480 = vshrl.u32 2131351028, %v2474
    %v2481 = vor.u32 %v2479, %v2480
    %v2482 = vshll.u32 2131351028, %v2473
    %v2483 = vshrl.u32 2102212464, %v2474
    %v2484 = vor.u32 %v2482, %v2483
    %v2485 = vshll.u32 2102212464, %v2473
    %v2486 = vshrl.u32 920167782, %v2474
    %v2487 = vor.u32 %v2485, %v2486
    %v2488 = vshll.u32 920167782, %v2473
    %v2489 = vshrl.u32 1326507024, %v2474
    %v2490 = vor.u32 %v2488, %v2489
    %vm2491 = vcmp.lt.s32.totalorder %v2472, 1
    %vm2492 = vcmp.lt.s32.totalorder %v2472, 2
    %vm2493 = vcmp.lt.s32.totalorder %v2472, 3
    %vm2494 = vcmp.lt.s32.totalorder %v2472, 4
    %v2495 = vsel %vm2491, %v2475, %v2478
    %v2496 = vsel %vm2494, %v2484, 2102212464
    %v2497 = vsel %vm2493, %v2481, %v2496
    %v2498 = vsel %vm2492, %v2495, %v2497
    %v2499 = vsel %vm2491, %v2478, %v2481
    %v2500 = vsel %vm2494, %v2487, 920167782
    %v2501 = vsel %vm2493, %v2484, %v2500
    %v2502 = vsel %vm2492, %v2499, %v2501
    %v2503 = vsel %vm2491, %v2481, %v2484
    %v2504 = vsel %vm2494, %v2490, 1326507024
    %v2505 = vsel %vm2493, %v2487, %v2504
    %v2506 = vsel %vm2492, %v2503, %v2505
    %v2507 = vshll.u32 %v2467, 8
    %v2508 = vmul.u32.u64.compose %v2507, %v2506
    %v2509 = vextract.low.u32 %v2508
    %v2510 = vextract.high.u32 %v2508
    %v2511 = vmul.u32.u64.compose %v2507, %v2502
    %v2512 = vextract.low.u32 %v2511
    %v2513 = vextract.high.u32 %v2511
    %v2514 = vmul.u32 %v2507, %v2498
    %v2515 = vadd.s32 %v2510, %v2512
    %vm2516 = vc.u32 %v2510, %v2512
    %v2517 = vadd.s32 %v2513, 1
    %v2518 = vsel %vm2516, %v2517, %v2513
    %v2519 = vadd.s32 %v2514, %v2518
    %v2520 = vadd.s32 %v2519, 536870912
    %v2521 = vshrl.u32 %v2520, 30
    %v2522 = vshll.u32 %v2521, 30
    %v2523 = vsub.s32 %v2519, %v2522
    %vm2524 = vcmp.lt.s32.totalorder %v2523, 0
    %v2525 = vsub.s32 0, %v2523
    %v2526 = vsel %vm2524, %v2525, %v2523
    %v2527 = vclz %v2526
    %v2528 = vsub.s32 %v2527, 2
    %vm2529 = vcmp.gt.s32.totalorder 0, %v2528
    %v2530 = vsel %vm2529, 0, %v2528
    %v2531 = vsub.s32 32, %v2530
    %v2532 = vshll.u32 %v2523, %v2530
    %v2533 = vshrl.u32 %v2515, %v2531
    %v2534 = vor.u32 %v2532, %v2533
    %v2535 = vsub.s32 4294967266, %v2530
    %v2536 = vadd.s32 %v2535, 127
    %v2537 = vshll.u32 %v2536, 23
    %v2538 = vor.u32 4788187, %v2537
    %v2539 = vand.u32 2147483647, %v2538
    %v2541 = vcvt.s32.f32 %v2534
    %v2542 = vmul.f32 %v2541, %v2539
    %v2543 = vxor.u32 %v2542, 2147483648
    %v2544 = vsel %vm2461, %v2543, %v2542
    %v2545 = vsub.s32 4, %v2521
    %v2546 = vsel %vm2461, %v2545, %v2521
    %v2547 = vsel %vm2460, %v2457, %v2544
    %v2548 = vsel %vm2460, 0, %v2546
    %v2549 = vcosq.f32.pop %v2547
    %v2550 = vsinq.f32.pop %v2547
    %vm2551 = vweird.f32 %v2457
    %v2552 = vadd.s32 %v2548, 3
    %v2553 = vand.u32 %v2552, 3
    %vm2554 = vcmp.lt.s32.totalorder %v2553, 2
    %vm2555 = vcmp.eq.s32.totalorder %v2553, 0
    %v2556 = vxor.u32 %v2550, 2147483648
    %v2557 = vsel %vm2555, %v2549, %v2556
    %vm2558 = vcmp.eq.s32.totalorder %v2553, 2
    %v2559 = vxor.u32 %v2549, 2147483648
    %v2560 = vsel %vm2558, %v2559, %v2550
    %v2561 = vsel %vm2554, %v2557, %v2560
    %v2562 = vsel %vm2551, nan, %v2561
    %v2563 = vand.u32 2147483647, %v2458
    %vm2564 = vcmp.le.f32.partialorder %v2563, 0.7853982
    %vm2565 = vcmp.lt.s32.totalorder %v2458, 0
    %v2566 = vand.u32 %v2458, 2139095040
    %v2567 = vshrl.u32 %v2566, 23
    %v2568 = vsub.s32 %v2567, 127
    %v2569 = vand.u32 2147483647, %v2458
    %v2570 = vand.u32 %v2569, 8388607
    %v2571 = vor.u32 %v2570, 8388608
    %v2572 = vsub.s32 0, %v2571
    %v2573 = vadd.s32 %v2568, 1
    %vm2574 = vcmp.gt.s32.totalorder %v2573, 0
    %v2575 = vsel %vm2574, %v2573, 0
    %v2576 = vshrl.u32 %v2575, 5
    %v2577 = vand.u32 %v2575, 31
    %v2578 = vsub.s32 32, %v2577
    %v2579 = vshrl.u32 683565275, %v2578
    %v2580 = vshll.u32 683565275, %v2577
    %v2581 = vshrl.u32 2475754826, %v2578
    %v2582 = vor.u32 %v2580, %v2581
    %v2583 = vshll.u32 2475754826, %v2577
    %v2584 = vshrl.u32 2131351028, %v2578
    %v2585 = vor.u32 %v2583, %v2584
    %v2586 = vshll.u32 2131351028, %v2577
    %v2587 = vshrl.u32 2102212464, %v2578
    %v2588 = vor.u32 %v2586, %v2587
    %v2589 = vshll.u32 2102212464, %v2577
    %v2590 = vshrl.u32 920167782, %v2578
    %v2591 = vor.u32 %v2589, %v2590
    %v2592 = vshll.u32 920167782, %v2577
    %v2593 = vshrl.u32 1326507024, %v2578
    %v2594 = vor.u32 %v2592, %v2593
    %vm2595 = vcmp.lt.s32.totalorder %v2576, 1
    %vm2596 = vcmp.lt.s32.totalorder %v2576, 2
    %vm2597 = vcmp.lt.s32.totalorder %v2576, 3
    %vm2598 = vcmp.lt.s32.totalorder %v2576, 4
    %v2599 = vsel %vm2595, %v2579, %v2582
    %v2600 = vsel %vm2598, %v2588, 2102212464
    %v2601 = vsel %vm2597, %v2585, %v2600
    %v2602 = vsel %vm2596, %v2599, %v2601
    %v2603 = vsel %vm2595, %v2582, %v2585
    %v2604 = vsel %vm2598, %v2591, 920167782
    %v2605 = vsel %vm2597, %v2588, %v2604
    %v2606 = vsel %vm2596, %v2603, %v2605
    %v2607 = vsel %vm2595, %v2585, %v2588
    %v2608 = vsel %vm2598, %v2594, 1326507024
    %v2609 = vsel %vm2597, %v2591, %v2608
    %v2610 = vsel %vm2596, %v2607, %v2609
    %v2611 = vshll.u32 %v2571, 8
    %v2612 = vmul.u32.u64.compose %v2611, %v2610
    %v2613 = vextract.low.u32 %v2612
    %v2614 = vextract.high.u32 %v2612
    %v2615 = vmul.u32.u64.compose %v2611, %v2606
    %v2616 = vextract.low.u32 %v2615
    %v2617 = vextract.high.u32 %v2615
    %v2618 = vmul.u32 %v2611, %v2602
    %v2619 = vadd.s32 %v2614, %v2616
    %vm2620 = vc.u32 %v2614, %v2616
    %v2621 = vadd.s32 %v2617, 1
    %v2622 = vsel %vm2620, %v2621, %v2617
    %v2623 = vadd.s32 %v2618, %v2622
    %v2624 = vadd.s32 %v2623, 536870912
    %v2625 = vshrl.u32 %v2624, 30
    %v2626 = vshll.u32 %v2625, 30
    %v2627 = vsub.s32 %v2623, %v2626
    %vm2628 = vcmp.lt.s32.totalorder %v2627, 0
    %v2629 = vsub.s32 0, %v2627
    %v2630 = vsel %vm2628, %v2629, %v2627
    %v2631 = vclz %v2630
    %v2632 = vsub.s32 %v2631, 2
    %vm2633 = vcmp.gt.s32.totalorder 0, %v2632
    %v2634 = vsel %vm2633, 0, %v2632
    %v2635 = vsub.s32 32, %v2634
    %v2636 = vshll.u32 %v2627, %v2634
    %v2637 = vshrl.u32 %v2619, %v2635
    %v2638 = vor.u32 %v2636, %v2637
    %v2639 = vsub.s32 4294967266, %v2634
    %v2640 = vadd.s32 %v2639, 127
    %v2641 = vshll.u32 %v2640, 23
    %v2642 = vor.u32 4788187, %v2641
    %v2643 = vand.u32 2147483647, %v2642
    %v2645 = vcvt.s32.f32 %v2638
    %v2646 = vmul.f32 %v2645, %v2643
    %v2647 = vxor.u32 %v2646, 2147483648
    %v2648 = vsel %vm2565, %v2647, %v2646
    %v2649 = vsub.s32 4, %v2625
    %v2650 = vsel %vm2565, %v2649, %v2625
    %v2651 = vsel %vm2564, %v2458, %v2648
    %v2652 = vsel %vm2564, 0, %v2650
    %v2653 = vcosq.f32.pop %v2651
    %v2654 = vsinq.f32.pop %v2651
    %vm2655 = vweird.f32 %v2458
    %v2656 = vadd.s32 %v2652, 3
    %v2657 = vand.u32 %v2656, 3
    %vm2658 = vcmp.lt.s32.totalorder %v2657, 2
    %vm2659 = vcmp.eq.s32.totalorder %v2657, 0
    %v2660 = vxor.u32 %v2654, 2147483648
    %v2661 = vsel %vm2659, %v2653, %v2660
    %vm2662 = vcmp.eq.s32.totalorder %v2657, 2
    %v2663 = vxor.u32 %v2653, 2147483648
    %v2664 = vsel %vm2662, %v2663, %v2654
    %v2665 = vsel %vm2658, %v2661, %v2664
    %v2666 = vsel %vm2655, nan, %v2665
    %2669 = vrot.lane.b32.xlu0 %v2562, 36
    %v2670 = vpop.permute.xlu0 %2669
    %2671 = vrot.lane.b32.xlu0 %v2666, 36
    %v2672 = vpop.permute.xlu0 %2671
    %vm2675 = vcmask 318752
    %2676 = vst.msk [vmem:[#allocation2] sm:$0xff] %vm2675, %v2670
    %2677 = vst.msk [vmem:[#allocation2 + $0x8] sm:$0xff] %vm2675, %v2672
    // Predicated region
    $region6: #{tpu_custom_call.1} parent=1 // pred_check
      _
    $region7: #{tpu_custom_call.1} parent=1 // pred_check_branch
      %2679 = sbr.rel (0) target = $region9
    $region8: #{tpu_custom_call.1} parent=1 // pred_region
      %s2681 = ssub.s32 256, 256
      %2682 = vsyncadd [#allocation3], %s2681
      %s2683 = sshll.u32 [#allocation2], 4
      %s2684 = int_to_ptr.vmem [resolvable:$true] %s2683
      %2689 = dma.vmem_to_hbm [thread:$0]  %s2684, 256, %s1, [#allocation3], 128, 128, 8
    $region9: #{tpu_custom_call.1} parent=1 // pred_fallthru
      _
    // Predicated region
    $region10: #{tpu_custom_call.1} parent=1 // pred_check
      _
    $region11: #{tpu_custom_call.1} parent=1 // pred_check_branch
      %2691 = sbr.rel (0) target = $region13
    $region12: #{tpu_custom_call.1} parent=1 // pred_region
      %2692 = dma.done [#allocation3], 256
    $region13: #{tpu_custom_call.1} parent=1 // pred_fallthru
      _
    %2693 = vsyncpa [#allocation3], 1

</llo_original>
